<compile_context>
chip_gen: v7x
topology: tpu7x:2x2x1
jax: 0.10.0
libtpu: 0.0.40
codegen_flags: <defaults>
</compile_context>

<pallas_src>
import functools

import jax
import jax.numpy as jnp
from jax.experimental import pallas as pl
from jax.experimental.pallas import tpu as pltpu


_MAX_UNROLL_STEPS = 16  # full Python unroll below this; fori_loop above (vreg pressure)


def _gru_head_kernel(x_ref, wih_ref, whh_ref, bgi_ref, bhn_ref, wfc_ref, bfc_ref,
                     out_ref):
    """Fused GRU recurrence + classifier head for one batch tile.

    x_ref  : (S, TB, I)  time-major input tile (bf16)
    wih_ref: (I, 3H)     fused input->hidden weights, gate order [r|z|n] (bf16)
    whh_ref: (H, 3H)     fused hidden->hidden weights, gate order [r|z|n] (bf16)
    bgi_ref: (1, 3H)     [b_ir+b_hr | b_iz+b_hz | b_in]  (f32)
    bhn_ref: (1, H)      b_hn (stays inside r*(.))       (f32)
    wfc_ref: (H, Cp)     fc weight, lane-padded to Cp=128k (bf16)
    bfc_ref: (1, Cp)     fc bias, lane-padded              (f32)
    out_ref: (TB, Cp)    lane-dense padded logits          (f32)
    """
    S, TB, I = x_ref.shape
    H = whh_ref.shape[0]

    # Hoisted, gate-fused input projection for every timestep of this batch tile:
    # one (S*TB, I) x (I, 3H) MXU matmul, bf16 inputs / f32 accumulation.
    x2d = x_ref[...].reshape(S * TB, I)
    gi = jnp.dot(x2d, wih_ref[...], preferred_element_type=jnp.float32)
    gi = (gi + bgi_ref[...]).reshape(S, TB, 3 * H)   # time-major: gi[t] is contiguous

    whh = whh_ref[...]          # (H, 3H) bf16, loaded once
    bhn = bhn_ref[...]          # (1, H) f32, hoisted

    def gru_step(gi_t, h):
        # Single h-dependent MXU dot per step (the serial critical path).
        gh = jnp.dot(h.astype(whh.dtype), whh, preferred_element_type=jnp.float32)
        r = jax.nn.sigmoid(gi_t[:, :H] + gh[:, :H])
        z = jax.nn.sigmoid(gi_t[:, H:2 * H] + gh[:, H:2 * H])
        n = jnp.tanh(gi_t[:, 2 * H:] + r * (gh[:, 2 * H:] + bhn))  # b_hn inside r*, as PyTorch
        return n + z * (h - n)                                      # == (1-z)*n + z*h

    # Hidden state carried in vregs (loop carry), never bounced through VMEM scratch.
    h = jnp.zeros((TB, H), jnp.float32)
    if S <= _MAX_UNROLL_STEPS:
        for t in range(S):                    # static unroll: scheduler overlaps slices
            h = gru_step(gi[t], h)
    else:
        h = jax.lax.fori_loop(0, S, lambda t, hh: gru_step(gi[t], hh), h, unroll=2)

    # out[:, -1, :] -> dropout(rate=0.0) identity -> fc (lane-dense padded store)
    logits = jnp.dot(h.astype(wfc_ref.dtype), wfc_ref[...],
                     preferred_element_type=jnp.float32) + bfc_ref[...]
    out_ref[...] = logits.astype(out_ref.dtype)


@functools.partial(jax.jit, static_argnames=("batch_block",))
def gru_classifier_forward(x, params, *, batch_block=None):
    """x: (B, S, I) float32, batch_first like the PyTorch module. Returns (B, C) f32."""
    B, S, I = x.shape
    H = params["whh"].shape[0]
    C = params["wfc"].shape[-1]
    Cp = 128 * pl.cdiv(C, 128)                       # lane-dense head width
    if batch_block is not None:
        TB = batch_block
    else:
        TB = 8 if (B % 8 == 0) else B                # one f32 sublane group per step

    # Time-major + bf16 MXU inputs (the transpose happens once, outside the recurrence).
    x_tm = jnp.transpose(x, (1, 0, 2)).astype(jnp.bfloat16)      # (S, B, I)
    wih = params["wih"].astype(jnp.bfloat16)                     # (I, 3H)
    whh = params["whh"].astype(jnp.bfloat16)                     # (H, 3H)
    bih, bhh = params["bih"], params["bhh"]
    # Fold r/z hidden biases into the (once-computed) input projection bias.
    b_gi = jnp.concatenate([bih[:, :2 * H] + bhh[:, :2 * H], bih[:, 2 * H:]], axis=1)
    b_hn = bhh[:, 2 * H:]
    wfc = jnp.pad(params["wfc"].astype(jnp.bfloat16), ((0, 0), (0, Cp - C)))
    bfc = jnp.pad(params["bfc"], ((0, 0), (0, Cp - C)))

    grid = (pl.cdiv(B, TB),)
    out = pl.pallas_call(
        _gru_head_kernel,
        out_shape=jax.ShapeDtypeStruct((B, Cp), jnp.float32),
        grid=grid,
        in_specs=[
            pl.BlockSpec((S, TB, I), lambda b: (0, b, 0)),       # batch tile, time-major
            pl.BlockSpec((I, 3 * H), lambda b: (0, 0)),          # resident weights
            pl.BlockSpec((H, 3 * H), lambda b: (0, 0)),
            pl.BlockSpec((1, 3 * H), lambda b: (0, 0)),
            pl.BlockSpec((1, H), lambda b: (0, 0)),
            pl.BlockSpec((H, Cp), lambda b: (0, 0)),
            pl.BlockSpec((1, Cp), lambda b: (0, 0)),
        ],
        out_specs=pl.BlockSpec((TB, Cp), lambda b: (b, 0)),
        compiler_params=pltpu.CompilerParams(
            dimension_semantics=("parallel",),                   # shard batch across TCs
            vmem_limit_bytes=32 * 1024 * 1024,
        ),
    )(x_tm, wih, whh, b_gi, b_hn, wfc, bfc)
    return out[:, :C]


def init_params(key, input_size, hidden_size, num_classes):
    """Deterministic init matching PyTorch GRU/Linear (uniform +/- 1/sqrt(H)),
    stored gate-fused ([r|z|n] along the last dim) and transposed for right-multiply."""
    ks = jax.random.split(key, 6)
    bound = 1.0 / jnp.sqrt(jnp.float32(hidden_size))
    u = lambda k, shape: jax.random.uniform(k, shape, jnp.float32, -bound, bound)
    wih = u(ks[0], (input_size, 3 * hidden_size))
    whh = u(ks[1], (hidden_size, 3 * hidden_size))
    bih = u(ks[2], (1, 3 * hidden_size))
    bhh = u(ks[3], (1, 3 * hidden_size))
    wfc = u(ks[4], (hidden_size, num_classes))
    bfc = u(ks[5], (1, num_classes))
    return dict(wih=wih, whh=whh, bih=bih, bhh=bhh, wfc=wfc, bfc=bfc)


def reference_forward(x, params, matmul_dtype=jnp.float32):
    """Pure-JAX reference of the PyTorch forward. matmul_dtype=bf16 mirrors the kernel's
    MXU input precision (f32 accumulation everywhere)."""
    B, S, I = x.shape
    H = params["whh"].shape[0]
    md = matmul_dtype
    prec = jax.lax.Precision.HIGHEST if md == jnp.float32 else None
    dot = lambda a, b: jnp.dot(a.astype(md), b.astype(md),
                               preferred_element_type=jnp.float32, precision=prec)
    h = jnp.zeros((B, H), jnp.float32)
    for t in range(S):
        gi = dot(x[:, t, :], params["wih"]) + params["bih"]
        gh = dot(h, params["whh"]) + params["bhh"]
        r = jax.nn.sigmoid(gi[:, :H] + gh[:, :H])
        z = jax.nn.sigmoid(gi[:, H:2 * H] + gh[:, H:2 * H])
        n = jnp.tanh(gi[:, 2 * H:] + r * gh[:, 2 * H:])
        h = (1.0 - z) * n + z * h
    return dot(h, params["wfc"]) + params["bfc"]


if __name__ == "__main__":
    B, S, I, H, C = 8, 8, 16, 128, 2   # H=128 = module default; 3H=384 lane-dense
    key = jax.random.PRNGKey(0)
    kx, kp = jax.random.split(key)
    x = jax.random.normal(kx, (B, S, I), jnp.float32)
    params = init_params(kp, I, H, C)

    logits = gru_classifier_forward(x, params)
    logits = jax.block_until_ready(logits)
    assert logits.shape == (B, C)

    # Tight check vs a reference with matching (bf16-in / f32-acc) matmul precision,
    # loose check vs the full-f32 reference (kernel uses bf16 MXU inputs per review).
    ref_bf16 = reference_forward(x, params, jnp.bfloat16)
    ref_f32 = reference_forward(x, params, jnp.float32)
    assert jnp.allclose(logits, ref_bf16, atol=1e-3, rtol=1e-3), "mismatch vs matched-precision reference"
    assert jnp.allclose(logits, ref_f32, atol=3e-2, rtol=3e-2), "drift vs f32 reference too large"
    print("KERNEL_OK")
</pallas_src>

<mosaic_0001>
module attributes {stable_mosaic.version = 11 : i64} {
  func.func @_gru_head_kernel(%arg0: i32, %arg1: memref<8x8x16xbf16, #tpu.memory_space<vmem>>, %arg2: memref<16x384xbf16, #tpu.memory_space<vmem>>, %arg3: memref<128x384xbf16, #tpu.memory_space<vmem>>, %arg4: memref<1x384xf32, #tpu.memory_space<vmem>>, %arg5: memref<1x128xf32, #tpu.memory_space<vmem>>, %arg6: memref<128x128xbf16, #tpu.memory_space<vmem>>, %arg7: memref<1x128xf32, #tpu.memory_space<vmem>>, %arg8: memref<8x128xf32, #tpu.memory_space<vmem>>) attributes {dimension_semantics = [#tpu.dimension_semantics<parallel>], iteration_bounds = array<i64: 1>, scalar_prefetch = 0 : i64, scratch_operands = 0 : i64, tpu.core_type = #tpu.core_type<tc>, window_params = [{transform_indices = @transform_0, window_bounds = array<i64: 8, 8, 16>}, {pipeline_mode = #tpu.pipeline_mode<synchronous>, transform_indices = @transform_1, window_bounds = array<i64: 16, 384>}, {pipeline_mode = #tpu.pipeline_mode<synchronous>, transform_indices = @transform_2, window_bounds = array<i64: 128, 384>}, {pipeline_mode = #tpu.pipeline_mode<synchronous>, transform_indices = @transform_3, window_bounds = array<i64: 1, 384>}, {pipeline_mode = #tpu.pipeline_mode<synchronous>, transform_indices = @transform_4, window_bounds = array<i64: 1, 128>}, {pipeline_mode = #tpu.pipeline_mode<synchronous>, transform_indices = @transform_5, window_bounds = array<i64: 128, 128>}, {pipeline_mode = #tpu.pipeline_mode<synchronous>, transform_indices = @transform_6, window_bounds = array<i64: 1, 128>}, {transform_indices = @transform_7, window_bounds = array<i64: 8, 128>}]} {
    %c0 = arith.constant 0 : index
    %c0_0 = arith.constant 0 : index
    %c0_1 = arith.constant 0 : index
    %0 = vector.load %arg1[%c0, %c0_0, %c0_1] : memref<8x8x16xbf16, #tpu.memory_space<vmem>>, vector<8x8x16xbf16>
    %1 = vector.shape_cast %0 : vector<8x8x16xbf16> to vector<64x16xbf16>
    %c0_2 = arith.constant 0 : index
    %c0_3 = arith.constant 0 : index
    %2 = vector.load %arg2[%c0_2, %c0_3] : memref<16x384xbf16, #tpu.memory_space<vmem>>, vector<16x384xbf16>
    %cst = arith.constant dense<0.000000e+00> : vector<64x384xf32>
    %3 = tpu.matmul %1, %2, %cst {dimension_numbers = #tpu.dot_dimension_numbers<[1], [0], [0], [1], [0, 0, 1, 1], [], []>} : vector<64x16xbf16>, vector<16x384xbf16>, vector<64x384xf32> -> vector<64x384xf32>
    %c0_4 = arith.constant 0 : index
    %c0_5 = arith.constant 0 : index
    %4 = vector.load %arg4[%c0_4, %c0_5] : memref<1x384xf32, #tpu.memory_space<vmem>>, vector<1x384xf32>
    %5 = vector.broadcast %4 : vector<1x384xf32> to vector<64x384xf32>
    %6 = arith.addf %3, %5 : vector<64x384xf32>
    %7 = vector.shape_cast %6 : vector<64x384xf32> to vector<8x8x384xf32>
    %c0_6 = arith.constant 0 : index
    %c0_7 = arith.constant 0 : index
    %8 = vector.load %arg3[%c0_6, %c0_7] : memref<128x384xbf16, #tpu.memory_space<vmem>>, vector<128x384xbf16>
    %c0_8 = arith.constant 0 : index
    %c0_9 = arith.constant 0 : index
    %9 = vector.load %arg5[%c0_8, %c0_9] : memref<1x128xf32, #tpu.memory_space<vmem>>, vector<1x128xf32>
    %cst_10 = arith.constant 0.000000e+00 : f32
    %10 = vector.broadcast %cst_10 : f32 to vector<8x128xf32>
    %11 = vector.extract_strided_slice %7 {offsets = [0, 0, 0], sizes = [1, 8, 384], strides = [1, 1, 1]} : vector<8x8x384xf32> to vector<1x8x384xf32>
    %12 = vector.shape_cast %11 : vector<1x8x384xf32> to vector<8x384xf32>
    %13 = arith.truncf %10 : vector<8x128xf32> to vector<8x128xbf16>
    %cst_11 = arith.constant dense<0.000000e+00> : vector<8x384xf32>
    %14 = tpu.matmul %13, %8, %cst_11 {dimension_numbers = #tpu.dot_dimension_numbers<[1], [0], [0], [1], [0, 0, 1, 1], [], []>} : vector<8x128xbf16>, vector<128x384xbf16>, vector<8x384xf32> -> vector<8x384xf32>
    %15 = vector.extract_strided_slice %12 {offsets = [0, 0], sizes = [8, 128], strides = [1, 1]} : vector<8x384xf32> to vector<8x128xf32>
    %16 = vector.extract_strided_slice %14 {offsets = [0, 0], sizes = [8, 128], strides = [1, 1]} : vector<8x384xf32> to vector<8x128xf32>
    %17 = arith.addf %15, %16 : vector<8x128xf32>
    %18 = arith.negf %17 : vector<8x128xf32>
    %19 = math.exp %18 : vector<8x128xf32>
    %cst_12 = arith.constant 1.000000e+00 : f32
    %20 = vector.broadcast %cst_12 : f32 to vector<8x128xf32>
    %21 = arith.addf %20, %19 : vector<8x128xf32>
    %22 = arith.divf %20, %21 : vector<8x128xf32>
    %23 = vector.extract_strided_slice %12 {offsets = [0, 128], sizes = [8, 128], strides = [1, 1]} : vector<8x384xf32> to vector<8x128xf32>
    %24 = vector.extract_strided_slice %14 {offsets = [0, 128], sizes = [8, 128], strides = [1, 1]} : vector<8x384xf32> to vector<8x128xf32>
    %25 = arith.addf %23, %24 : vector<8x128xf32>
    %26 = arith.negf %25 : vector<8x128xf32>
    %27 = math.exp %26 : vector<8x128xf32>
    %cst_13 = arith.constant 1.000000e+00 : f32
    %28 = vector.broadcast %cst_13 : f32 to vector<8x128xf32>
    %29 = arith.addf %28, %27 : vector<8x128xf32>
    %30 = arith.divf %28, %29 : vector<8x128xf32>
    %31 = vector.extract_strided_slice %12 {offsets = [0, 256], sizes = [8, 128], strides = [1, 1]} : vector<8x384xf32> to vector<8x128xf32>
    %32 = vector.extract_strided_slice %14 {offsets = [0, 256], sizes = [8, 128], strides = [1, 1]} : vector<8x384xf32> to vector<8x128xf32>
    %33 = vector.broadcast %9 : vector<1x128xf32> to vector<8x128xf32>
    %34 = arith.addf %32, %33 : vector<8x128xf32>
    %35 = arith.mulf %22, %34 : vector<8x128xf32>
    %36 = arith.addf %31, %35 : vector<8x128xf32>
    %37 = math.tanh %36 : vector<8x128xf32>
    %38 = arith.subf %10, %37 : vector<8x128xf32>
    %39 = arith.mulf %30, %38 : vector<8x128xf32>
    %40 = arith.addf %37, %39 : vector<8x128xf32>
    %41 = vector.extract_strided_slice %7 {offsets = [1, 0, 0], sizes = [1, 8, 384], strides = [1, 1, 1]} : vector<8x8x384xf32> to vector<1x8x384xf32>
    %42 = vector.shape_cast %41 : vector<1x8x384xf32> to vector<8x384xf32>
    %43 = arith.truncf %40 : vector<8x128xf32> to vector<8x128xbf16>
    %cst_14 = arith.constant dense<0.000000e+00> : vector<8x384xf32>
    %44 = tpu.matmul %43, %8, %cst_14 {dimension_numbers = #tpu.dot_dimension_numbers<[1], [0], [0], [1], [0, 0, 1, 1], [], []>} : vector<8x128xbf16>, vector<128x384xbf16>, vector<8x384xf32> -> vector<8x384xf32>
    %45 = vector.extract_strided_slice %42 {offsets = [0, 0], sizes = [8, 128], strides = [1, 1]} : vector<8x384xf32> to vector<8x128xf32>
    %46 = vector.extract_strided_slice %44 {offsets = [0, 0], sizes = [8, 128], strides = [1, 1]} : vector<8x384xf32> to vector<8x128xf32>
    %47 = arith.addf %45, %46 : vector<8x128xf32>
    %48 = arith.negf %47 : vector<8x128xf32>
    %49 = math.exp %48 : vector<8x128xf32>
    %cst_15 = arith.constant 1.000000e+00 : f32
    %50 = vector.broadcast %cst_15 : f32 to vector<8x128xf32>
    %51 = arith.addf %50, %49 : vector<8x128xf32>
    %52 = arith.divf %50, %51 : vector<8x128xf32>
    %53 = vector.extract_strided_slice %42 {offsets = [0, 128], sizes = [8, 128], strides = [1, 1]} : vector<8x384xf32> to vector<8x128xf32>
    %54 = vector.extract_strided_slice %44 {offsets = [0, 128], sizes = [8, 128], strides = [1, 1]} : vector<8x384xf32> to vector<8x128xf32>
    %55 = arith.addf %53, %54 : vector<8x128xf32>
    %56 = arith.negf %55 : vector<8x128xf32>
    %57 = math.exp %56 : vector<8x128xf32>
    %cst_16 = arith.constant 1.000000e+00 : f32
    %58 = vector.broadcast %cst_16 : f32 to vector<8x128xf32>
    %59 = arith.addf %58, %57 : vector<8x128xf32>
    %60 = arith.divf %58, %59 : vector<8x128xf32>
    %61 = vector.extract_strided_slice %42 {offsets = [0, 256], sizes = [8, 128], strides = [1, 1]} : vector<8x384xf32> to vector<8x128xf32>
    %62 = vector.extract_strided_slice %44 {offsets = [0, 256], sizes = [8, 128], strides = [1, 1]} : vector<8x384xf32> to vector<8x128xf32>
    %63 = vector.broadcast %9 : vector<1x128xf32> to vector<8x128xf32>
    %64 = arith.addf %62, %63 : vector<8x128xf32>
    %65 = arith.mulf %52, %64 : vector<8x128xf32>
    %66 = arith.addf %61, %65 : vector<8x128xf32>
    %67 = math.tanh %66 : vector<8x128xf32>
    %68 = arith.subf %40, %67 : vector<8x128xf32>
    %69 = arith.mulf %60, %68 : vector<8x128xf32>
    %70 = arith.addf %67, %69 : vector<8x128xf32>
    %71 = vector.extract_strided_slice %7 {offsets = [2, 0, 0], sizes = [1, 8, 384], strides = [1, 1, 1]} : vector<8x8x384xf32> to vector<1x8x384xf32>
    %72 = vector.shape_cast %71 : vector<1x8x384xf32> to vector<8x384xf32>
    %73 = arith.truncf %70 : vector<8x128xf32> to vector<8x128xbf16>
    %cst_17 = arith.constant dense<0.000000e+00> : vector<8x384xf32>
    %74 = tpu.matmul %73, %8, %cst_17 {dimension_numbers = #tpu.dot_dimension_numbers<[1], [0], [0], [1], [0, 0, 1, 1], [], []>} : vector<8x128xbf16>, vector<128x384xbf16>, vector<8x384xf32> -> vector<8x384xf32>
    %75 = vector.extract_strided_slice %72 {offsets = [0, 0], sizes = [8, 128], strides = [1, 1]} : vector<8x384xf32> to vector<8x128xf32>
    %76 = vector.extract_strided_slice %74 {offsets = [0, 0], sizes = [8, 128], strides = [1, 1]} : vector<8x384xf32> to vector<8x128xf32>
    %77 = arith.addf %75, %76 : vector<8x128xf32>
    %78 = arith.negf %77 : vector<8x128xf32>
    %79 = math.exp %78 : vector<8x128xf32>
    %cst_18 = arith.constant 1.000000e+00 : f32
    %80 = vector.broadcast %cst_18 : f32 to vector<8x128xf32>
    %81 = arith.addf %80, %79 : vector<8x128xf32>
    %82 = arith.divf %80, %81 : vector<8x128xf32>
    %83 = vector.extract_strided_slice %72 {offsets = [0, 128], sizes = [8, 128], strides = [1, 1]} : vector<8x384xf32> to vector<8x128xf32>
    %84 = vector.extract_strided_slice %74 {offsets = [0, 128], sizes = [8, 128], strides = [1, 1]} : vector<8x384xf32> to vector<8x128xf32>
    %85 = arith.addf %83, %84 : vector<8x128xf32>
    %86 = arith.negf %85 : vector<8x128xf32>
    %87 = math.exp %86 : vector<8x128xf32>
    %cst_19 = arith.constant 1.000000e+00 : f32
    %88 = vector.broadcast %cst_19 : f32 to vector<8x128xf32>
    %89 = arith.addf %88, %87 : vector<8x128xf32>
    %90 = arith.divf %88, %89 : vector<8x128xf32>
    %91 = vector.extract_strided_slice %72 {offsets = [0, 256], sizes = [8, 128], strides = [1, 1]} : vector<8x384xf32> to vector<8x128xf32>
    %92 = vector.extract_strided_slice %74 {offsets = [0, 256], sizes = [8, 128], strides = [1, 1]} : vector<8x384xf32> to vector<8x128xf32>
    %93 = vector.broadcast %9 : vector<1x128xf32> to vector<8x128xf32>
    %94 = arith.addf %92, %93 : vector<8x128xf32>
    %95 = arith.mulf %82, %94 : vector<8x128xf32>
    %96 = arith.addf %91, %95 : vector<8x128xf32>
    %97 = math.tanh %96 : vector<8x128xf32>
    %98 = arith.subf %70, %97 : vector<8x128xf32>
    %99 = arith.mulf %90, %98 : vector<8x128xf32>
    %100 = arith.addf %97, %99 : vector<8x128xf32>
    %101 = vector.extract_strided_slice %7 {offsets = [3, 0, 0], sizes = [1, 8, 384], strides = [1, 1, 1]} : vector<8x8x384xf32> to vector<1x8x384xf32>
    %102 = vector.shape_cast %101 : vector<1x8x384xf32> to vector<8x384xf32>
    %103 = arith.truncf %100 : vector<8x128xf32> to vector<8x128xbf16>
    %cst_20 = arith.constant dense<0.000000e+00> : vector<8x384xf32>
    %104 = tpu.matmul %103, %8, %cst_20 {dimension_numbers = #tpu.dot_dimension_numbers<[1], [0], [0], [1], [0, 0, 1, 1], [], []>} : vector<8x128xbf16>, vector<128x384xbf16>, vector<8x384xf32> -> vector<8x384xf32>
    %105 = vector.extract_strided_slice %102 {offsets = [0, 0], sizes = [8, 128], strides = [1, 1]} : vector<8x384xf32> to vector<8x128xf32>
    %106 = vector.extract_strided_slice %104 {offsets = [0, 0], sizes = [8, 128], strides = [1, 1]} : vector<8x384xf32> to vector<8x128xf32>
    %107 = arith.addf %105, %106 : vector<8x128xf32>
    %108 = arith.negf %107 : vector<8x128xf32>
    %109 = math.exp %108 : vector<8x128xf32>
    %cst_21 = arith.constant 1.000000e+00 : f32
    %110 = vector.broadcast %cst_21 : f32 to vector<8x128xf32>
    %111 = arith.addf %110, %109 : vector<8x128xf32>
    %112 = arith.divf %110, %111 : vector<8x128xf32>
    %113 = vector.extract_strided_slice %102 {offsets = [0, 128], sizes = [8, 128], strides = [1, 1]} : vector<8x384xf32> to vector<8x128xf32>
    %114 = vector.extract_strided_slice %104 {offsets = [0, 128], sizes = [8, 128], strides = [1, 1]} : vector<8x384xf32> to vector<8x128xf32>
    %115 = arith.addf %113, %114 : vector<8x128xf32>
    %116 = arith.negf %115 : vector<8x128xf32>
    %117 = math.exp %116 : vector<8x128xf32>
    %cst_22 = arith.constant 1.000000e+00 : f32
    %118 = vector.broadcast %cst_22 : f32 to vector<8x128xf32>
    %119 = arith.addf %118, %117 : vector<8x128xf32>
    %120 = arith.divf %118, %119 : vector<8x128xf32>
    %121 = vector.extract_strided_slice %102 {offsets = [0, 256], sizes = [8, 128], strides = [1, 1]} : vector<8x384xf32> to vector<8x128xf32>
    %122 = vector.extract_strided_slice %104 {offsets = [0, 256], sizes = [8, 128], strides = [1, 1]} : vector<8x384xf32> to vector<8x128xf32>
    %123 = vector.broadcast %9 : vector<1x128xf32> to vector<8x128xf32>
    %124 = arith.addf %122, %123 : vector<8x128xf32>
    %125 = arith.mulf %112, %124 : vector<8x128xf32>
    %126 = arith.addf %121, %125 : vector<8x128xf32>
    %127 = math.tanh %126 : vector<8x128xf32>
    %128 = arith.subf %100, %127 : vector<8x128xf32>
    %129 = arith.mulf %120, %128 : vector<8x128xf32>
    %130 = arith.addf %127, %129 : vector<8x128xf32>
    %131 = vector.extract_strided_slice %7 {offsets = [4, 0, 0], sizes = [1, 8, 384], strides = [1, 1, 1]} : vector<8x8x384xf32> to vector<1x8x384xf32>
    %132 = vector.shape_cast %131 : vector<1x8x384xf32> to vector<8x384xf32>
    %133 = arith.truncf %130 : vector<8x128xf32> to vector<8x128xbf16>
    %cst_23 = arith.constant dense<0.000000e+00> : vector<8x384xf32>
    %134 = tpu.matmul %133, %8, %cst_23 {dimension_numbers = #tpu.dot_dimension_numbers<[1], [0], [0], [1], [0, 0, 1, 1], [], []>} : vector<8x128xbf16>, vector<128x384xbf16>, vector<8x384xf32> -> vector<8x384xf32>
    %135 = vector.extract_strided_slice %132 {offsets = [0, 0], sizes = [8, 128], strides = [1, 1]} : vector<8x384xf32> to vector<8x128xf32>
    %136 = vector.extract_strided_slice %134 {offsets = [0, 0], sizes = [8, 128], strides = [1, 1]} : vector<8x384xf32> to vector<8x128xf32>
    %137 = arith.addf %135, %136 : vector<8x128xf32>
    %138 = arith.negf %137 : vector<8x128xf32>
    %139 = math.exp %138 : vector<8x128xf32>
    %cst_24 = arith.constant 1.000000e+00 : f32
    %140 = vector.broadcast %cst_24 : f32 to vector<8x128xf32>
    %141 = arith.addf %140, %139 : vector<8x128xf32>
    %142 = arith.divf %140, %141 : vector<8x128xf32>
    %143 = vector.extract_strided_slice %132 {offsets = [0, 128], sizes = [8, 128], strides = [1, 1]} : vector<8x384xf32> to vector<8x128xf32>
    %144 = vector.extract_strided_slice %134 {offsets = [0, 128], sizes = [8, 128], strides = [1, 1]} : vector<8x384xf32> to vector<8x128xf32>
    %145 = arith.addf %143, %144 : vector<8x128xf32>
    %146 = arith.negf %145 : vector<8x128xf32>
    %147 = math.exp %146 : vector<8x128xf32>
    %cst_25 = arith.constant 1.000000e+00 : f32
    %148 = vector.broadcast %cst_25 : f32 to vector<8x128xf32>
    %149 = arith.addf %148, %147 : vector<8x128xf32>
    %150 = arith.divf %148, %149 : vector<8x128xf32>
    %151 = vector.extract_strided_slice %132 {offsets = [0, 256], sizes = [8, 128], strides = [1, 1]} : vector<8x384xf32> to vector<8x128xf32>
    %152 = vector.extract_strided_slice %134 {offsets = [0, 256], sizes = [8, 128], strides = [1, 1]} : vector<8x384xf32> to vector<8x128xf32>
    %153 = vector.broadcast %9 : vector<1x128xf32> to vector<8x128xf32>
    %154 = arith.addf %152, %153 : vector<8x128xf32>
    %155 = arith.mulf %142, %154 : vector<8x128xf32>
    %156 = arith.addf %151, %155 : vector<8x128xf32>
    %157 = math.tanh %156 : vector<8x128xf32>
    %158 = arith.subf %130, %157 : vector<8x128xf32>
    %159 = arith.mulf %150, %158 : vector<8x128xf32>
    %160 = arith.addf %157, %159 : vector<8x128xf32>
    %161 = vector.extract_strided_slice %7 {offsets = [5, 0, 0], sizes = [1, 8, 384], strides = [1, 1, 1]} : vector<8x8x384xf32> to vector<1x8x384xf32>
    %162 = vector.shape_cast %161 : vector<1x8x384xf32> to vector<8x384xf32>
    %163 = arith.truncf %160 : vector<8x128xf32> to vector<8x128xbf16>
    %cst_26 = arith.constant dense<0.000000e+00> : vector<8x384xf32>
    %164 = tpu.matmul %163, %8, %cst_26 {dimension_numbers = #tpu.dot_dimension_numbers<[1], [0], [0], [1], [0, 0, 1, 1], [], []>} : vector<8x128xbf16>, vector<128x384xbf16>, vector<8x384xf32> -> vector<8x384xf32>
    %165 = vector.extract_strided_slice %162 {offsets = [0, 0], sizes = [8, 128], strides = [1, 1]} : vector<8x384xf32> to vector<8x128xf32>
    %166 = vector.extract_strided_slice %164 {offsets = [0, 0], sizes = [8, 128], strides = [1, 1]} : vector<8x384xf32> to vector<8x128xf32>
    %167 = arith.addf %165, %166 : vector<8x128xf32>
    %168 = arith.negf %167 : vector<8x128xf32>
    %169 = math.exp %168 : vector<8x128xf32>
    %cst_27 = arith.constant 1.000000e+00 : f32
    %170 = vector.broadcast %cst_27 : f32 to vector<8x128xf32>
    %171 = arith.addf %170, %169 : vector<8x128xf32>
    %172 = arith.divf %170, %171 : vector<8x128xf32>
    %173 = vector.extract_strided_slice %162 {offsets = [0, 128], sizes = [8, 128], strides = [1, 1]} : vector<8x384xf32> to vector<8x128xf32>
    %174 = vector.extract_strided_slice %164 {offsets = [0, 128], sizes = [8, 128], strides = [1, 1]} : vector<8x384xf32> to vector<8x128xf32>
    %175 = arith.addf %173, %174 : vector<8x128xf32>
    %176 = arith.negf %175 : vector<8x128xf32>
    %177 = math.exp %176 : vector<8x128xf32>
    %cst_28 = arith.constant 1.000000e+00 : f32
    %178 = vector.broadcast %cst_28 : f32 to vector<8x128xf32>
    %179 = arith.addf %178, %177 : vector<8x128xf32>
    %180 = arith.divf %178, %179 : vector<8x128xf32>
    %181 = vector.extract_strided_slice %162 {offsets = [0, 256], sizes = [8, 128], strides = [1, 1]} : vector<8x384xf32> to vector<8x128xf32>
    %182 = vector.extract_strided_slice %164 {offsets = [0, 256], sizes = [8, 128], strides = [1, 1]} : vector<8x384xf32> to vector<8x128xf32>
    %183 = vector.broadcast %9 : vector<1x128xf32> to vector<8x128xf32>
    %184 = arith.addf %182, %183 : vector<8x128xf32>
    %185 = arith.mulf %172, %184 : vector<8x128xf32>
    %186 = arith.addf %181, %185 : vector<8x128xf32>
    %187 = math.tanh %186 : vector<8x128xf32>
    %188 = arith.subf %160, %187 : vector<8x128xf32>
    %189 = arith.mulf %180, %188 : vector<8x128xf32>
    %190 = arith.addf %187, %189 : vector<8x128xf32>
    %191 = vector.extract_strided_slice %7 {offsets = [6, 0, 0], sizes = [1, 8, 384], strides = [1, 1, 1]} : vector<8x8x384xf32> to vector<1x8x384xf32>
    %192 = vector.shape_cast %191 : vector<1x8x384xf32> to vector<8x384xf32>
    %193 = arith.truncf %190 : vector<8x128xf32> to vector<8x128xbf16>
    %cst_29 = arith.constant dense<0.000000e+00> : vector<8x384xf32>
    %194 = tpu.matmul %193, %8, %cst_29 {dimension_numbers = #tpu.dot_dimension_numbers<[1], [0], [0], [1], [0, 0, 1, 1], [], []>} : vector<8x128xbf16>, vector<128x384xbf16>, vector<8x384xf32> -> vector<8x384xf32>
    %195 = vector.extract_strided_slice %192 {offsets = [0, 0], sizes = [8, 128], strides = [1, 1]} : vector<8x384xf32> to vector<8x128xf32>
    %196 = vector.extract_strided_slice %194 {offsets = [0, 0], sizes = [8, 128], strides = [1, 1]} : vector<8x384xf32> to vector<8x128xf32>
    %197 = arith.addf %195, %196 : vector<8x128xf32>
    %198 = arith.negf %197 : vector<8x128xf32>
    %199 = math.exp %198 : vector<8x128xf32>
    %cst_30 = arith.constant 1.000000e+00 : f32
    %200 = vector.broadcast %cst_30 : f32 to vector<8x128xf32>
    %201 = arith.addf %200, %199 : vector<8x128xf32>
    %202 = arith.divf %200, %201 : vector<8x128xf32>
    %203 = vector.extract_strided_slice %192 {offsets = [0, 128], sizes = [8, 128], strides = [1, 1]} : vector<8x384xf32> to vector<8x128xf32>
    %204 = vector.extract_strided_slice %194 {offsets = [0, 128], sizes = [8, 128], strides = [1, 1]} : vector<8x384xf32> to vector<8x128xf32>
    %205 = arith.addf %203, %204 : vector<8x128xf32>
    %206 = arith.negf %205 : vector<8x128xf32>
    %207 = math.exp %206 : vector<8x128xf32>
    %cst_31 = arith.constant 1.000000e+00 : f32
    %208 = vector.broadcast %cst_31 : f32 to vector<8x128xf32>
    %209 = arith.addf %208, %207 : vector<8x128xf32>
    %210 = arith.divf %208, %209 : vector<8x128xf32>
    %211 = vector.extract_strided_slice %192 {offsets = [0, 256], sizes = [8, 128], strides = [1, 1]} : vector<8x384xf32> to vector<8x128xf32>
    %212 = vector.extract_strided_slice %194 {offsets = [0, 256], sizes = [8, 128], strides = [1, 1]} : vector<8x384xf32> to vector<8x128xf32>
    %213 = vector.broadcast %9 : vector<1x128xf32> to vector<8x128xf32>
    %214 = arith.addf %212, %213 : vector<8x128xf32>
    %215 = arith.mulf %202, %214 : vector<8x128xf32>
    %216 = arith.addf %211, %215 : vector<8x128xf32>
    %217 = math.tanh %216 : vector<8x128xf32>
    %218 = arith.subf %190, %217 : vector<8x128xf32>
    %219 = arith.mulf %210, %218 : vector<8x128xf32>
    %220 = arith.addf %217, %219 : vector<8x128xf32>
    %221 = vector.extract_strided_slice %7 {offsets = [7, 0, 0], sizes = [1, 8, 384], strides = [1, 1, 1]} : vector<8x8x384xf32> to vector<1x8x384xf32>
    %222 = vector.shape_cast %221 : vector<1x8x384xf32> to vector<8x384xf32>
    %223 = arith.truncf %220 : vector<8x128xf32> to vector<8x128xbf16>
    %cst_32 = arith.constant dense<0.000000e+00> : vector<8x384xf32>
    %224 = tpu.matmul %223, %8, %cst_32 {dimension_numbers = #tpu.dot_dimension_numbers<[1], [0], [0], [1], [0, 0, 1, 1], [], []>} : vector<8x128xbf16>, vector<128x384xbf16>, vector<8x384xf32> -> vector<8x384xf32>
    %225 = vector.extract_strided_slice %222 {offsets = [0, 0], sizes = [8, 128], strides = [1, 1]} : vector<8x384xf32> to vector<8x128xf32>
    %226 = vector.extract_strided_slice %224 {offsets = [0, 0], sizes = [8, 128], strides = [1, 1]} : vector<8x384xf32> to vector<8x128xf32>
    %227 = arith.addf %225, %226 : vector<8x128xf32>
    %228 = arith.negf %227 : vector<8x128xf32>
    %229 = math.exp %228 : vector<8x128xf32>
    %cst_33 = arith.constant 1.000000e+00 : f32
    %230 = vector.broadcast %cst_33 : f32 to vector<8x128xf32>
    %231 = arith.addf %230, %229 : vector<8x128xf32>
    %232 = arith.divf %230, %231 : vector<8x128xf32>
    %233 = vector.extract_strided_slice %222 {offsets = [0, 128], sizes = [8, 128], strides = [1, 1]} : vector<8x384xf32> to vector<8x128xf32>
    %234 = vector.extract_strided_slice %224 {offsets = [0, 128], sizes = [8, 128], strides = [1, 1]} : vector<8x384xf32> to vector<8x128xf32>
    %235 = arith.addf %233, %234 : vector<8x128xf32>
    %236 = arith.negf %235 : vector<8x128xf32>
    %237 = math.exp %236 : vector<8x128xf32>
    %cst_34 = arith.constant 1.000000e+00 : f32
    %238 = vector.broadcast %cst_34 : f32 to vector<8x128xf32>
    %239 = arith.addf %238, %237 : vector<8x128xf32>
    %240 = arith.divf %238, %239 : vector<8x128xf32>
    %241 = vector.extract_strided_slice %222 {offsets = [0, 256], sizes = [8, 128], strides = [1, 1]} : vector<8x384xf32> to vector<8x128xf32>
    %242 = vector.extract_strided_slice %224 {offsets = [0, 256], sizes = [8, 128], strides = [1, 1]} : vector<8x384xf32> to vector<8x128xf32>
    %243 = vector.broadcast %9 : vector<1x128xf32> to vector<8x128xf32>
    %244 = arith.addf %242, %243 : vector<8x128xf32>
    %245 = arith.mulf %232, %244 : vector<8x128xf32>
    %246 = arith.addf %241, %245 : vector<8x128xf32>
    %247 = math.tanh %246 : vector<8x128xf32>
    %248 = arith.subf %220, %247 : vector<8x128xf32>
    %249 = arith.mulf %240, %248 : vector<8x128xf32>
    %250 = arith.addf %247, %249 : vector<8x128xf32>
    %251 = arith.truncf %250 : vector<8x128xf32> to vector<8x128xbf16>
    %c0_35 = arith.constant 0 : index
    %c0_36 = arith.constant 0 : index
    %252 = vector.load %arg6[%c0_35, %c0_36] : memref<128x128xbf16, #tpu.memory_space<vmem>>, vector<128x128xbf16>
    %cst_37 = arith.constant dense<0.000000e+00> : vector<8x128xf32>
    %253 = tpu.matmul %251, %252, %cst_37 {dimension_numbers = #tpu.dot_dimension_numbers<[1], [0], [0], [1], [0, 0, 1, 1], [], []>} : vector<8x128xbf16>, vector<128x128xbf16>, vector<8x128xf32> -> vector<8x128xf32>
    %c0_38 = arith.constant 0 : index
    %c0_39 = arith.constant 0 : index
    %254 = vector.load %arg7[%c0_38, %c0_39] : memref<1x128xf32, #tpu.memory_space<vmem>>, vector<1x128xf32>
    %255 = vector.broadcast %254 : vector<1x128xf32> to vector<8x128xf32>
    %256 = arith.addf %253, %255 : vector<8x128xf32>
    %c0_40 = arith.constant 0 : index
    %c0_41 = arith.constant 0 : index
    %257 = vector.load %arg8[%c0_40, %c0_41] : memref<8x128xf32, #tpu.memory_space<vmem>>, vector<8x128xf32>
    tpu.vector_store %arg8[%c0_40, %c0_41], %256 {strides = array<i32>} : memref<8x128xf32, #tpu.memory_space<vmem>>, vector<8x128xf32>,
    return
  }
  func.func @transform_0(%arg0: i32) -> (i32, i32, i32) {
    %c0_i32 = arith.constant 0 : i32
    %c0_i32_0 = arith.constant 0 : i32
    %c0_i32_1 = arith.constant 0 : i32
    return %c0_i32, %arg0, %c0_i32_0 : i32, i32, i32
  }
  func.func @transform_1(%arg0: i32) -> (i32, i32) {
    %c0_i32 = arith.constant 0 : i32
    %c0_i32_0 = arith.constant 0 : i32
    %c0_i32_1 = arith.constant 0 : i32
    return %c0_i32, %c0_i32_0 : i32, i32
  }
  func.func @transform_2(%arg0: i32) -> (i32, i32) {
    %c0_i32 = arith.constant 0 : i32
    %c0_i32_0 = arith.constant 0 : i32
    %c0_i32_1 = arith.constant 0 : i32
    return %c0_i32, %c0_i32_0 : i32, i32
  }
  func.func @transform_3(%arg0: i32) -> (i32, i32) {
    %c0_i32 = arith.constant 0 : i32
    %c0_i32_0 = arith.constant 0 : i32
    %c0_i32_1 = arith.constant 0 : i32
    return %c0_i32, %c0_i32_0 : i32, i32
  }
  func.func @transform_4(%arg0: i32) -> (i32, i32) {
    %c0_i32 = arith.constant 0 : i32
    %c0_i32_0 = arith.constant 0 : i32
    %c0_i32_1 = arith.constant 0 : i32
    return %c0_i32, %c0_i32_0 : i32, i32
  }
  func.func @transform_5(%arg0: i32) -> (i32, i32) {
    %c0_i32 = arith.constant 0 : i32
    %c0_i32_0 = arith.constant 0 : i32
    %c0_i32_1 = arith.constant 0 : i32
    return %c0_i32, %c0_i32_0 : i32, i32
  }
  func.func @transform_6(%arg0: i32) -> (i32, i32) {
    %c0_i32 = arith.constant 0 : i32
    %c0_i32_0 = arith.constant 0 : i32
    %c0_i32_1 = arith.constant 0 : i32
    return %c0_i32, %c0_i32_0 : i32, i32
  }
  func.func @transform_7(%arg0: i32) -> (i32, i32) {
    %c0_i32 = arith.constant 0 : i32
    %c0_i32_0 = arith.constant 0 : i32
    return %arg0, %c0_i32 : i32, i32
  }
}

</mosaic_0001>

<llo_original>
// kernel: gru_classifier_forward.1
$region0: #{gru_classifier_forward.1}
  #allocation0 [shape = 'u32[]', space=smem, size = 0x4, offset = 0x4, fixed_abs, tag = 'smem constant byte address 0x4 - core index']
  #allocation1 [shape = 'u32[144,128]{1,0:T(1,128)}', space=vmem, size = 0x12000, scoped, tag = 'internal scratch']
  %s0 = inlined_call_operand.vmem [shape: bf16[8,8,16], index: 0, kind: input, shape index: {}]
  %s1 = inlined_call_operand.vmem [shape: bf16[16,384], index: 1, kind: input, shape index: {}]
  %s2 = inlined_call_operand.vmem [shape: bf16[128,384], index: 2, kind: input, shape index: {}]
  %s3 = inlined_call_operand.vmem [shape: f32[1,384], index: 3, kind: input, shape index: {}]
  %s4 = inlined_call_operand.vmem [shape: f32[1,128], index: 4, kind: input, shape index: {}]
  %s5 = inlined_call_operand.vmem [shape: bf16[128,128], index: 5, kind: input, shape index: {}]
  %s6 = inlined_call_operand.vmem [shape: f32[1,128], index: 6, kind: input, shape index: {}]
  %s7 = inlined_call_operand.vmem [shape: f32[8,128], index: 7, kind: output, shape index: {}]
  %s8 = sld [smem:[#allocation0]]
  $region38: #{gru_classifier_forward.1} parent=0
    _
  %s10 = ssub.s32 1, %s8
  %s11 = scalar_select 0, %s10, %s8
  // Predicated region
  $region2: #{gru_classifier_forward.1} parent=0 // pred_check
    _
  $region3: #{gru_classifier_forward.1} parent=0 // pred_check_branch
    %13 = sbr.rel (0) target = $region5
  $region4: #{gru_classifier_forward.1} parent=0 // pred_region
    _
  $region5: #{gru_classifier_forward.1} parent=0 // pred_fallthru
    _
  // Predicated region
  $region6: #{gru_classifier_forward.1} parent=0 // pred_check
    _
  $region7: #{gru_classifier_forward.1} parent=0 // pred_check_branch
    %15 = sbr.rel (0) target = $region9
  $region8: #{gru_classifier_forward.1} parent=0 // pred_region
    _
  $region9: #{gru_classifier_forward.1} parent=0 // pred_fallthru
    _
  // Predicated region
  $region10: #{gru_classifier_forward.1} parent=0 // pred_check
    _
  $region11: #{gru_classifier_forward.1} parent=0 // pred_check_branch
    %17 = sbr.rel (0) target = $region13
  $region12: #{gru_classifier_forward.1} parent=0 // pred_region
    _
  $region13: #{gru_classifier_forward.1} parent=0 // pred_fallthru
    _
  // Predicated region
  $region14: #{gru_classifier_forward.1} parent=0 // pred_check
    _
  $region15: #{gru_classifier_forward.1} parent=0 // pred_check_branch
    %19 = sbr.rel (0) target = $region17
  $region16: #{gru_classifier_forward.1} parent=0 // pred_region
    _
  $region17: #{gru_classifier_forward.1} parent=0 // pred_fallthru
    _
  // Predicated region
  $region18: #{gru_classifier_forward.1} parent=0 // pred_check
    _
  $region19: #{gru_classifier_forward.1} parent=0 // pred_check_branch
    %21 = sbr.rel (0) target = $region21
  $region20: #{gru_classifier_forward.1} parent=0 // pred_region
    _
  $region21: #{gru_classifier_forward.1} parent=0 // pred_fallthru
    _
  // Predicated region
  $region22: #{gru_classifier_forward.1} parent=0 // pred_check
    _
  $region23: #{gru_classifier_forward.1} parent=0 // pred_check_branch
    %23 = sbr.rel (0) target = $region25
  $region24: #{gru_classifier_forward.1} parent=0 // pred_region
    _
  $region25: #{gru_classifier_forward.1} parent=0 // pred_fallthru
    _
  // Predicated region
  $region26: #{gru_classifier_forward.1} parent=0 // pred_check
    _
  $region27: #{gru_classifier_forward.1} parent=0 // pred_check_branch
    %25 = sbr.rel (0) target = $region29
  $region28: #{gru_classifier_forward.1} parent=0 // pred_region
    _
  $region29: #{gru_classifier_forward.1} parent=0 // pred_fallthru
    _
  %v27 = vld [vmem:[%s0] sm:$0xf]
  %v28 = vld [vmem:[%s0 + $0x4] sm:$0xf]
  %v29 = vld [vmem:[%s0 + $0x8] sm:$0xf]
  %v30 = vld [vmem:[%s0 + $0xc] sm:$0xf]
  %v31 = vld [vmem:[%s0 + $0x10] sm:$0xf]
  %v32 = vld [vmem:[%s0 + $0x14] sm:$0xf]
  %v33 = vld [vmem:[%s0 + $0x18] sm:$0xf]
  %v34 = vld [vmem:[%s0 + $0x1c] sm:$0xf]
  %v35 = vld [vmem:[%s1] sm:$0xff]
  %v36 = vld [vmem:[%s1 + $0x8] sm:$0xf]
  %v37 = vld [vmem:[%s1 + $0xc] sm:$0xff]
  %v38 = vld [vmem:[%s1 + $0x14] sm:$0xf]
  %v39 = vld [vmem:[%s3] sm:$0x7]
  %v41 = vlaneseq
  %v42 = vshrl.u32 %v41, 7
  %v43 = vsub.s32 0, %v42
  %v44 = vrot.slane %v39, %v43
  %v45 = vlaneseq
  %v46 = vshrl.u32 %v45, 7
  %v47 = vsub.s32 1, %v46
  %v48 = vrot.slane %v39, %v47
  %v49 = vlaneseq
  %v50 = vshrl.u32 %v49, 7
  %v51 = vsub.s32 2, %v50
  %v52 = vrot.slane %v39, %v51
  %v64 = vunpack.c.l.b16 %v27
  %v65 = vunpack.c.l.b16 %v28
  %v66 = vunpack.c.l.b16 %v29
  %v67 = vunpack.c.l.b16 %v30
  %v68 = vunpack.c.l.b16 %v31
  %v69 = vunpack.c.l.b16 %v32
  %v70 = vunpack.c.l.b16 %v33
  %v71 = vunpack.c.l.b16 %v34
  %v72 = vpack.c.b16 %v65, %v64
  %v73 = vpack.c.b16 %v67, %v66
  %v74 = vpack.c.b16 %v69, %v68
  %v75 = vpack.c.b16 %v71, %v70
  %v80 = vunpack.c.l.b16 %v35
  %v81 = vunpack.c.h.b16 %v35
  %v82 = vunpack.c.l.b16 %v36
  %v83 = vunpack.c.l.b16 %v37
  %v84 = vunpack.c.h.b16 %v37
  %v85 = vunpack.c.l.b16 %v38
  %v86 = vpack.c.b16 %v83, %v80
  %v87 = vpack.c.b16 %v84, %v81
  %v88 = vpack.c.b16 %v85, %v82
  %vm92 = vcmask 130048
  %v94 = vsel %vm92, %v72, 0
  %v97 = vsel %vm92, %v73, 0
  %v100 = vsel %vm92, %v74, 0
  %v103 = vsel %vm92, %v75, 0
  %105 = vmatprep.subr.bf16.mxu0 %v87
  %106 = vmatpush1.bf16.msra.mxu0 %v86
  %107 = vmatprep.subr.bf16.mxu0 0
  %108 = vmatpush1.bf16.msra.mxu0 0
  %109 = vmatprep.subr.bf16.mxu0 0
  %110 = vmatpush1.bf16.msra.mxu0 0
  %111 = vmatprep.subr.bf16.mxu0 0
  %112 = vmatpush1.bf16.msra.mxu0 0
  %113 = vmatprep.subr.bf16.mxu0 0
  %114 = vmatpush1.bf16.msra.mxu0 0
  %115 = vmatprep.subr.bf16.mxu0 0
  %116 = vmatpush1.bf16.msra.mxu0 0
  %117 = vmatprep.subr.bf16.mxu0 0
  %118 = vmatpush1.bf16.msra.mxu0 0
  %119 = vmatprep.subr.bf16.mxu0 0
  %120 = vmatpush1.bf16.msra.mxu0 0
  %121 = vmatprep.subr.bf16.mxu0 0
  %122 = vmatpush1.bf16.msra.mxu0 0
  %123 = vmatprep.subr.bf16.mxu0 0
  %124 = vmatpush1.bf16.msra.mxu0 0
  %125 = vmatprep.subr.bf16.mxu0 0
  %126 = vmatpush1.bf16.msra.mxu0 0
  %127 = vmatprep.subr.bf16.mxu0 0
  %128 = vmatpush1.bf16.msra.mxu0 0
  %129 = vmatprep.subr.bf16.mxu0 0
  %130 = vmatpush1.bf16.msra.mxu0 0
  %131 = vmatprep.subr.bf16.mxu0 0
  %132 = vmatpush1.bf16.msra.mxu0 0
  %133 = vmatprep.subr.bf16.mxu0 0
  %134 = vmatpush1.bf16.msra.mxu0 0
  %135 = vmatprep.subr.bf16.mxu0 0
  %136 = vmatpush1.bf16.msra.mxu0 0
  %137 = vmatprep.mubr.bf16.mxu0 0
  %138 = vmatmul.mubr.bf16.gmra.mrb[0].mxu0 %v94
  %v139 = vpop.f32.mrb[0].mxu0
  %v140 = vadd.f32 %v44, %v139
  %v141 = vpop.f32.mrb[0].mxu0
  %v142 = vadd.f32 %v48, %v141
  %v143 = vpop.f32.mrb[0].mxu0
  %v144 = vadd.f32 %v44, %v143
  %v145 = vpop.f32.mrb[0].mxu0
  %v146 = vadd.f32 %v48, %v145
  %147 = vmatprep.mubr.bf16.mxu0 0
  %148 = vmatmul.mubr.bf16.gmra.mrb[0].mxu0 %v97
  %v149 = vpop.f32.mrb[0].mxu0
  %v150 = vadd.f32 %v44, %v149
  %v151 = vpop.f32.mrb[0].mxu0
  %v152 = vadd.f32 %v48, %v151
  %v153 = vpop.f32.mrb[0].mxu0
  %v154 = vadd.f32 %v44, %v153
  %v155 = vpop.f32.mrb[0].mxu0
  %v156 = vadd.f32 %v48, %v155
  %157 = vmatprep.mubr.bf16.mxu0 0
  %158 = vmatmul.mubr.bf16.gmra.mrb[0].mxu0 %v100
  %v159 = vpop.f32.mrb[0].mxu0
  %v160 = vadd.f32 %v44, %v159
  %v161 = vpop.f32.mrb[0].mxu0
  %v162 = vadd.f32 %v48, %v161
  %v163 = vpop.f32.mrb[0].mxu0
  %v164 = vadd.f32 %v44, %v163
  %v165 = vpop.f32.mrb[0].mxu0
  %v166 = vadd.f32 %v48, %v165
  %167 = vmatprep.mubr.bf16.mxu0 0
  %168 = vmatmul.mubr.bf16.gmra.mrb[0].mxu0 %v103
  %v169 = vpop.f32.mrb[0].mxu0
  %v170 = vadd.f32 %v44, %v169
  %v171 = vpop.f32.mrb[0].mxu0
  %v172 = vadd.f32 %v48, %v171
  %v173 = vpop.f32.mrb[0].mxu0
  %v174 = vadd.f32 %v44, %v173
  %v175 = vpop.f32.mrb[0].mxu0
  %v176 = vadd.f32 %v48, %v175
  %177 = vdwg.mxu0
  %178 = vmatprep.subr.bf16.mxu0 0
  %179 = vmatpush1.bf16.msra.mxu0 %v88
  %180 = vmatprep.subr.bf16.mxu0 0
  %181 = vmatpush1.bf16.msra.mxu0 0
  %182 = vmatprep.subr.bf16.mxu0 0
  %183 = vmatpush1.bf16.msra.mxu0 0
  %184 = vmatprep.subr.bf16.mxu0 0
  %185 = vmatpush1.bf16.msra.mxu0 0
  %186 = vmatprep.subr.bf16.mxu0 0
  %187 = vmatpush1.bf16.msra.mxu0 0
  %188 = vmatprep.subr.bf16.mxu0 0
  %189 = vmatpush1.bf16.msra.mxu0 0
  %190 = vmatprep.subr.bf16.mxu0 0
  %191 = vmatpush1.bf16.msra.mxu0 0
  %192 = vmatprep.subr.bf16.mxu0 0
  %193 = vmatpush1.bf16.msra.mxu0 0
  %194 = vmatprep.subr.bf16.mxu0 0
  %195 = vmatpush1.bf16.msra.mxu0 0
  %196 = vmatprep.subr.bf16.mxu0 0
  %197 = vmatpush1.bf16.msra.mxu0 0
  %198 = vmatprep.subr.bf16.mxu0 0
  %199 = vmatpush1.bf16.msra.mxu0 0
  %200 = vmatprep.subr.bf16.mxu0 0
  %201 = vmatpush1.bf16.msra.mxu0 0
  %202 = vmatprep.subr.bf16.mxu0 0
  %203 = vmatpush1.bf16.msra.mxu0 0
  %204 = vmatprep.subr.bf16.mxu0 0
  %205 = vmatpush1.bf16.msra.mxu0 0
  %206 = vmatprep.subr.bf16.mxu0 0
  %207 = vmatpush1.bf16.msra.mxu0 0
  %208 = vmatprep.subr.bf16.mxu0 0
  %209 = vmatpush1.bf16.msra.mxu0 0
  %210 = vmatprep.mubr.bf16.mxu0 0
  %211 = vmatmul.mubr.bf16.gmra.mrb[0].mxu0 %v94
  %v212 = vpop.f32.mrb[0].mxu0
  %v213 = vadd.f32 %v52, %v212
  %v214 = vpop.f32.mrb[0].mxu0
  %v215 = vpop.f32.mrb[0].mxu0
  %v216 = vadd.f32 %v52, %v215
  %v217 = vpop.f32.mrb[0].mxu0
  %218 = vmatprep.mubr.bf16.mxu0 0
  %219 = vmatmul.mubr.bf16.gmra.mrb[0].mxu0 %v97
  %v220 = vpop.f32.mrb[0].mxu0
  %v221 = vadd.f32 %v52, %v220
  %v222 = vpop.f32.mrb[0].mxu0
  %v223 = vpop.f32.mrb[0].mxu0
  %v224 = vadd.f32 %v52, %v223
  %v225 = vpop.f32.mrb[0].mxu0
  %226 = vmatprep.mubr.bf16.mxu0 0
  %227 = vmatmul.mubr.bf16.gmra.mrb[0].mxu0 %v100
  %v228 = vpop.f32.mrb[0].mxu0
  %v229 = vadd.f32 %v52, %v228
  %v230 = vpop.f32.mrb[0].mxu0
  %v231 = vpop.f32.mrb[0].mxu0
  %v232 = vadd.f32 %v52, %v231
  %v233 = vpop.f32.mrb[0].mxu0
  %234 = vmatprep.mubr.bf16.mxu0 0
  %235 = vmatmul.mubr.bf16.gmra.mrb[0].mxu0 %v103
  %v236 = vpop.f32.mrb[0].mxu0
  %v237 = vadd.f32 %v52, %v236
  %v238 = vpop.f32.mrb[0].mxu0
  %v239 = vpop.f32.mrb[0].mxu0
  %v240 = vadd.f32 %v52, %v239
  %v241 = vpop.f32.mrb[0].mxu0
  %242 = vdwg.mxu0
  %v243 = vld [vmem:[%s2] sm:$0xff]
  %v244 = vld [vmem:[%s2 + $0x8] sm:$0xf]
  %v245 = vld [vmem:[%s2 + $0xc] sm:$0xff]
  %v246 = vld [vmem:[%s2 + $0x14] sm:$0xf]
  %v247 = vld [vmem:[%s2 + $0x18] sm:$0xff]
  %v248 = vld [vmem:[%s2 + $0x20] sm:$0xf]
  %v249 = vld [vmem:[%s2 + $0x24] sm:$0xff]
  %v250 = vld [vmem:[%s2 + $0x2c] sm:$0xf]
  %v251 = vld [vmem:[%s2 + $0x30] sm:$0xff]
  %v252 = vld [vmem:[%s2 + $0x38] sm:$0xf]
  %v253 = vld [vmem:[%s2 + $0x3c] sm:$0xff]
  %v254 = vld [vmem:[%s2 + $0x44] sm:$0xf]
  %v255 = vld [vmem:[%s2 + $0x48] sm:$0xff]
  %v256 = vld [vmem:[%s2 + $0x50] sm:$0xf]
  %v257 = vld [vmem:[%s2 + $0x54] sm:$0xff]
  %v258 = vld [vmem:[%s2 + $0x5c] sm:$0xf]
  %v259 = vld [vmem:[%s2 + $0x60] sm:$0xff]
  %v260 = vld [vmem:[%s2 + $0x68] sm:$0xf]
  %v261 = vld [vmem:[%s2 + $0x6c] sm:$0xff]
  %v262 = vld [vmem:[%s2 + $0x74] sm:$0xf]
  %v263 = vld [vmem:[%s2 + $0x78] sm:$0xff]
  %v264 = vld [vmem:[%s2 + $0x80] sm:$0xf]
  %v265 = vld [vmem:[%s2 + $0x84] sm:$0xff]
  %v266 = vld [vmem:[%s2 + $0x8c] sm:$0xf]
  %v267 = vld [vmem:[%s2 + $0x90] sm:$0xff]
  %v268 = vld [vmem:[%s2 + $0x98] sm:$0xf]
  %v269 = vld [vmem:[%s2 + $0x9c] sm:$0xff]
  %v270 = vld [vmem:[%s2 + $0xa4] sm:$0xf]
  %v271 = vld [vmem:[%s2 + $0xa8] sm:$0xff]
  %v272 = vld [vmem:[%s2 + $0xb0] sm:$0xf]
  %v273 = vld [vmem:[%s2 + $0xb4] sm:$0xff]
  %v274 = vld [vmem:[%s2 + $0xbc] sm:$0xf]
  %v275 = vld [vmem:[%s4] sm:$0x1]
  %v308 = vunpack.c.l.b16 %v243
  %v309 = vunpack.c.h.b16 %v243
  %v310 = vunpack.c.l.b16 %v244
  %v311 = vunpack.c.l.b16 %v245
  %v312 = vunpack.c.h.b16 %v245
  %v313 = vunpack.c.l.b16 %v246
  %v314 = vunpack.c.l.b16 %v247
  %v315 = vunpack.c.h.b16 %v247
  %v316 = vunpack.c.l.b16 %v248
  %v317 = vunpack.c.l.b16 %v249
  %v318 = vunpack.c.h.b16 %v249
  %v319 = vunpack.c.l.b16 %v250
  %v320 = vunpack.c.l.b16 %v251
  %v321 = vunpack.c.h.b16 %v251
  %v322 = vunpack.c.l.b16 %v252
  %v323 = vunpack.c.l.b16 %v253
  %v324 = vunpack.c.h.b16 %v253
  %v325 = vunpack.c.l.b16 %v254
  %v326 = vunpack.c.l.b16 %v255
  %v327 = vunpack.c.h.b16 %v255
  %v328 = vunpack.c.l.b16 %v256
  %v329 = vunpack.c.l.b16 %v257
  %v330 = vunpack.c.h.b16 %v257
  %v331 = vunpack.c.l.b16 %v258
  %v332 = vunpack.c.l.b16 %v259
  %v333 = vunpack.c.h.b16 %v259
  %v334 = vunpack.c.l.b16 %v260
  %v335 = vunpack.c.l.b16 %v261
  %v336 = vunpack.c.h.b16 %v261
  %v337 = vunpack.c.l.b16 %v262
  %v338 = vunpack.c.l.b16 %v263
  %v339 = vunpack.c.h.b16 %v263
  %v340 = vunpack.c.l.b16 %v264
  %v341 = vunpack.c.l.b16 %v265
  %v342 = vunpack.c.h.b16 %v265
  %v343 = vunpack.c.l.b16 %v266
  %v344 = vunpack.c.l.b16 %v267
  %v345 = vunpack.c.h.b16 %v267
  %v346 = vunpack.c.l.b16 %v268
  %v347 = vunpack.c.l.b16 %v269
  %v348 = vunpack.c.h.b16 %v269
  %v349 = vunpack.c.l.b16 %v270
  %v350 = vunpack.c.l.b16 %v271
  %v351 = vunpack.c.h.b16 %v271
  %v352 = vunpack.c.l.b16 %v272
  %v353 = vunpack.c.l.b16 %v273
  %v354 = vunpack.c.h.b16 %v273
  %v355 = vunpack.c.l.b16 %v274
  %v356 = vpack.c.b16 %v311, %v308
  %v357 = vpack.c.b16 %v312, %v309
  %v358 = vpack.c.b16 %v313, %v310
  %v359 = vpack.c.b16 %v317, %v314
  %v360 = vpack.c.b16 %v318, %v315
  %v361 = vpack.c.b16 %v319, %v316
  %v362 = vpack.c.b16 %v323, %v320
  %v363 = vpack.c.b16 %v324, %v321
  %v364 = vpack.c.b16 %v325, %v322
  %v365 = vpack.c.b16 %v329, %v326
  %v366 = vpack.c.b16 %v330, %v327
  %v367 = vpack.c.b16 %v331, %v328
  %v368 = vpack.c.b16 %v335, %v332
  %v369 = vpack.c.b16 %v336, %v333
  %v370 = vpack.c.b16 %v337, %v334
  %v371 = vpack.c.b16 %v341, %v338
  %v372 = vpack.c.b16 %v342, %v339
  %v373 = vpack.c.b16 %v343, %v340
  %v374 = vpack.c.b16 %v347, %v344
  %v375 = vpack.c.b16 %v348, %v345
  %v376 = vpack.c.b16 %v349, %v346
  %v377 = vpack.c.b16 %v353, %v350
  %v378 = vpack.c.b16 %v354, %v351
  %v379 = vpack.c.b16 %v355, %v352
  %404 = vmatprep.subr.bf16.mxu0 %v357
  %405 = vmatpush1.bf16.msra.mxu0 %v356
  %406 = vmatprep.subr.bf16.mxu0 %v360
  %407 = vmatpush1.bf16.msra.mxu0 %v359
  %408 = vmatprep.subr.bf16.mxu0 %v363
  %409 = vmatpush1.bf16.msra.mxu0 %v362
  %410 = vmatprep.subr.bf16.mxu0 %v366
  %411 = vmatpush1.bf16.msra.mxu0 %v365
  %412 = vmatprep.subr.bf16.mxu0 %v369
  %413 = vmatpush1.bf16.msra.mxu0 %v368
  %414 = vmatprep.subr.bf16.mxu0 %v372
  %415 = vmatpush1.bf16.msra.mxu0 %v371
  %416 = vmatprep.subr.bf16.mxu0 %v375
  %417 = vmatpush1.bf16.msra.mxu0 %v374
  %418 = vmatprep.subr.bf16.mxu0 %v378
  %419 = vmatpush1.bf16.msra.mxu0 %v377
  %420 = vmatprep.subr.bf16.mxu0 0
  %421 = vmatpush1.bf16.msra.mxu0 0
  %422 = vmatprep.subr.bf16.mxu0 0
  %423 = vmatpush1.bf16.msra.mxu0 0
  %424 = vmatprep.subr.bf16.mxu0 0
  %425 = vmatpush1.bf16.msra.mxu0 0
  %426 = vmatprep.subr.bf16.mxu0 0
  %427 = vmatpush1.bf16.msra.mxu0 0
  %428 = vmatprep.subr.bf16.mxu0 0
  %429 = vmatpush1.bf16.msra.mxu0 0
  %430 = vmatprep.subr.bf16.mxu0 0
  %431 = vmatpush1.bf16.msra.mxu0 0
  %432 = vmatprep.subr.bf16.mxu0 0
  %433 = vmatpush1.bf16.msra.mxu0 0
  %434 = vmatprep.subr.bf16.mxu0 0
  %435 = vmatpush1.bf16.msra.mxu0 0
  %436 = vmatprep.mubr.bf16.mxu0 0
  %437 = vmatmul.mubr.bf16.gmra.mrb[0].mxu0 0
  %v438 = vpop.f32.mrb[0].mxu0
  %v439 = vadd.f32 0.0, %v438
  %v440 = vpop.f32.mrb[0].mxu0
  %v441 = vadd.f32 0.0, %v440
  %v442 = vpop.f32.mrb[0].mxu0
  %v443 = vpop.f32.mrb[0].mxu0
  %444 = vdwg.mxu0
  %445 = vmatprep.subr.bf16.mxu0 0
  %446 = vmatpush1.bf16.msra.mxu0 %v358
  %447 = vmatprep.subr.bf16.mxu0 0
  %448 = vmatpush1.bf16.msra.mxu0 %v361
  %449 = vmatprep.subr.bf16.mxu0 0
  %450 = vmatpush1.bf16.msra.mxu0 %v364
  %451 = vmatprep.subr.bf16.mxu0 0
  %452 = vmatpush1.bf16.msra.mxu0 %v367
  %453 = vmatprep.subr.bf16.mxu0 0
  %454 = vmatpush1.bf16.msra.mxu0 %v370
  %455 = vmatprep.subr.bf16.mxu0 0
  %456 = vmatpush1.bf16.msra.mxu0 %v373
  %457 = vmatprep.subr.bf16.mxu0 0
  %458 = vmatpush1.bf16.msra.mxu0 %v376
  %459 = vmatprep.subr.bf16.mxu0 0
  %460 = vmatpush1.bf16.msra.mxu0 %v379
  %461 = vmatprep.subr.bf16.mxu0 0
  %462 = vmatpush1.bf16.msra.mxu0 0
  %463 = vmatprep.subr.bf16.mxu0 0
  %464 = vmatpush1.bf16.msra.mxu0 0
  %465 = vmatprep.subr.bf16.mxu0 0
  %466 = vmatpush1.bf16.msra.mxu0 0
  %467 = vmatprep.subr.bf16.mxu0 0
  %468 = vmatpush1.bf16.msra.mxu0 0
  %469 = vmatprep.subr.bf16.mxu0 0
  %470 = vmatpush1.bf16.msra.mxu0 0
  %471 = vmatprep.subr.bf16.mxu0 0
  %472 = vmatpush1.bf16.msra.mxu0 0
  %473 = vmatprep.subr.bf16.mxu0 0
  %474 = vmatpush1.bf16.msra.mxu0 0
  %475 = vmatprep.subr.bf16.mxu0 0
  %476 = vmatpush1.bf16.msra.mxu0 0
  %477 = vmatprep.mubr.bf16.mxu0 0
  %478 = vmatmul.mubr.bf16.gmra.mrb[0].mxu0 0
  %v479 = vpop.f32.mrb[0].mxu0
  %v480 = vadd.f32 0.0, %v479
  %v481 = vpop.f32.mrb[0].mxu0
  %v482 = vpop.f32.mrb[0].mxu0
  %v483 = vpop.f32.mrb[0].mxu0
  %484 = vdwg.mxu0
  %v485 = vadd.f32 %v140, %v439
  %v486 = vxor.u32 %v485, 2147483648
  %v487 = vmul.f32 %v486, 1.442695
  %v488 = vpow.pop %v487
  %v489 = vadd.f32 %v488, 1.0
  %v490 = vrcp.pop %v489
  %v491 = vmul.f32 1.0, %v490
  %v492 = vadd.f32 %v142, %v441
  %v493 = vxor.u32 %v492, 2147483648
  %v494 = vmul.f32 %v493, 1.442695
  %v495 = vpow.pop %v494
  %v496 = vadd.f32 %v495, 1.0
  %v497 = vrcp.pop %v496
  %v498 = vmul.f32 1.0, %v497
  %v500 = vlaneseq
  %v501 = vshrl.u32 %v500, 7
  %v502 = vsub.s32 0, %v501
  %v503 = vrot.slane %v275, %v502
  %v505 = vadd.f32 %v480, %v503
  %v506 = vmul.f32 %v491, %v505
  %v507 = vadd.f32 %v213, %v506
  %v508 = vtanh.pop %v507
  %v509 = vsub.f32 0.0, %v508
  %v510 = vmul.f32 %v498, %v509
  %v511 = vadd.f32 %v508, %v510
  %v512 = vpack.c.bf16 %v511, %v511
  %513 = vmatprep.subr.bf16.mxu0 %v357
  %514 = vmatpush1.bf16.msra.mxu0 %v356
  %515 = vmatprep.subr.bf16.mxu0 %v360
  %516 = vmatpush1.bf16.msra.mxu0 %v359
  %517 = vmatprep.subr.bf16.mxu0 %v363
  %518 = vmatpush1.bf16.msra.mxu0 %v362
  %519 = vmatprep.subr.bf16.mxu0 %v366
  %520 = vmatpush1.bf16.msra.mxu0 %v365
  %521 = vmatprep.subr.bf16.mxu0 %v369
  %522 = vmatpush1.bf16.msra.mxu0 %v368
  %523 = vmatprep.subr.bf16.mxu0 %v372
  %524 = vmatpush1.bf16.msra.mxu0 %v371
  %525 = vmatprep.subr.bf16.mxu0 %v375
  %526 = vmatpush1.bf16.msra.mxu0 %v374
  %527 = vmatprep.subr.bf16.mxu0 %v378
  %528 = vmatpush1.bf16.msra.mxu0 %v377
  %529 = vmatprep.subr.bf16.mxu0 0
  %530 = vmatpush1.bf16.msra.mxu0 0
  %531 = vmatprep.subr.bf16.mxu0 0
  %532 = vmatpush1.bf16.msra.mxu0 0
  %533 = vmatprep.subr.bf16.mxu0 0
  %534 = vmatpush1.bf16.msra.mxu0 0
  %535 = vmatprep.subr.bf16.mxu0 0
  %536 = vmatpush1.bf16.msra.mxu0 0
  %537 = vmatprep.subr.bf16.mxu0 0
  %538 = vmatpush1.bf16.msra.mxu0 0
  %539 = vmatprep.subr.bf16.mxu0 0
  %540 = vmatpush1.bf16.msra.mxu0 0
  %541 = vmatprep.subr.bf16.mxu0 0
  %542 = vmatpush1.bf16.msra.mxu0 0
  %543 = vmatprep.subr.bf16.mxu0 0
  %544 = vmatpush1.bf16.msra.mxu0 0
  %545 = vmatprep.mubr.bf16.mxu0 0
  %546 = vmatmul.mubr.bf16.gmra.mrb[0].mxu0 %v512
  %v547 = vpop.f32.mrb[0].mxu0
  %v548 = vadd.f32 0.0, %v547
  %v549 = vpop.f32.mrb[0].mxu0
  %v550 = vadd.f32 0.0, %v549
  %v551 = vpop.f32.mrb[0].mxu0
  %v552 = vpop.f32.mrb[0].mxu0
  %553 = vdwg.mxu0
  %554 = vmatprep.subr.bf16.mxu0 0
  %555 = vmatpush1.bf16.msra.mxu0 %v358
  %556 = vmatprep.subr.bf16.mxu0 0
  %557 = vmatpush1.bf16.msra.mxu0 %v361
  %558 = vmatprep.subr.bf16.mxu0 0
  %559 = vmatpush1.bf16.msra.mxu0 %v364
  %560 = vmatprep.subr.bf16.mxu0 0
  %561 = vmatpush1.bf16.msra.mxu0 %v367
  %562 = vmatprep.subr.bf16.mxu0 0
  %563 = vmatpush1.bf16.msra.mxu0 %v370
  %564 = vmatprep.subr.bf16.mxu0 0
  %565 = vmatpush1.bf16.msra.mxu0 %v373
  %566 = vmatprep.subr.bf16.mxu0 0
  %567 = vmatpush1.bf16.msra.mxu0 %v376
  %568 = vmatprep.subr.bf16.mxu0 0
  %569 = vmatpush1.bf16.msra.mxu0 %v379
  %570 = vmatprep.subr.bf16.mxu0 0
  %571 = vmatpush1.bf16.msra.mxu0 0
  %572 = vmatprep.subr.bf16.mxu0 0
  %573 = vmatpush1.bf16.msra.mxu0 0
  %574 = vmatprep.subr.bf16.mxu0 0
  %575 = vmatpush1.bf16.msra.mxu0 0
  %576 = vmatprep.subr.bf16.mxu0 0
  %577 = vmatpush1.bf16.msra.mxu0 0
  %578 = vmatprep.subr.bf16.mxu0 0
  %579 = vmatpush1.bf16.msra.mxu0 0
  %580 = vmatprep.subr.bf16.mxu0 0
  %581 = vmatpush1.bf16.msra.mxu0 0
  %582 = vmatprep.subr.bf16.mxu0 0
  %583 = vmatpush1.bf16.msra.mxu0 0
  %584 = vmatprep.subr.bf16.mxu0 0
  %585 = vmatpush1.bf16.msra.mxu0 0
  %586 = vmatprep.mubr.bf16.mxu0 0
  %587 = vmatmul.mubr.bf16.gmra.mrb[0].mxu0 %v512
  %v588 = vpop.f32.mrb[0].mxu0
  %v589 = vadd.f32 0.0, %v588
  %v590 = vpop.f32.mrb[0].mxu0
  %v591 = vpop.f32.mrb[0].mxu0
  %v592 = vpop.f32.mrb[0].mxu0
  %593 = vdwg.mxu0
  %v594 = vadd.f32 %v144, %v548
  %v595 = vxor.u32 %v594, 2147483648
  %v596 = vmul.f32 %v595, 1.442695
  %v597 = vpow.pop %v596
  %v598 = vadd.f32 %v597, 1.0
  %v599 = vrcp.pop %v598
  %v600 = vmul.f32 1.0, %v599
  %v601 = vadd.f32 %v146, %v550
  %v602 = vxor.u32 %v601, 2147483648
  %v603 = vmul.f32 %v602, 1.442695
  %v604 = vpow.pop %v603
  %v605 = vadd.f32 %v604, 1.0
  %v606 = vrcp.pop %v605
  %v607 = vmul.f32 1.0, %v606
  %v608 = vadd.f32 %v589, %v503
  %v609 = vmul.f32 %v600, %v608
  %v610 = vadd.f32 %v216, %v609
  %v611 = vtanh.pop %v610
  %v612 = vsub.f32 %v511, %v611
  %v613 = vmul.f32 %v607, %v612
  %v614 = vadd.f32 %v611, %v613
  %v615 = vpack.c.bf16 %v614, %v614
  %616 = vmatprep.subr.bf16.mxu0 %v357
  %617 = vmatpush1.bf16.msra.mxu0 %v356
  %618 = vmatprep.subr.bf16.mxu0 %v360
  %619 = vmatpush1.bf16.msra.mxu0 %v359
  %620 = vmatprep.subr.bf16.mxu0 %v363
  %621 = vmatpush1.bf16.msra.mxu0 %v362
  %622 = vmatprep.subr.bf16.mxu0 %v366
  %623 = vmatpush1.bf16.msra.mxu0 %v365
  %624 = vmatprep.subr.bf16.mxu0 %v369
  %625 = vmatpush1.bf16.msra.mxu0 %v368
  %626 = vmatprep.subr.bf16.mxu0 %v372
  %627 = vmatpush1.bf16.msra.mxu0 %v371
  %628 = vmatprep.subr.bf16.mxu0 %v375
  %629 = vmatpush1.bf16.msra.mxu0 %v374
  %630 = vmatprep.subr.bf16.mxu0 %v378
  %631 = vmatpush1.bf16.msra.mxu0 %v377
  %632 = vmatprep.subr.bf16.mxu0 0
  %633 = vmatpush1.bf16.msra.mxu0 0
  %634 = vmatprep.subr.bf16.mxu0 0
  %635 = vmatpush1.bf16.msra.mxu0 0
  %636 = vmatprep.subr.bf16.mxu0 0
  %637 = vmatpush1.bf16.msra.mxu0 0
  %638 = vmatprep.subr.bf16.mxu0 0
  %639 = vmatpush1.bf16.msra.mxu0 0
  %640 = vmatprep.subr.bf16.mxu0 0
  %641 = vmatpush1.bf16.msra.mxu0 0
  %642 = vmatprep.subr.bf16.mxu0 0
  %643 = vmatpush1.bf16.msra.mxu0 0
  %644 = vmatprep.subr.bf16.mxu0 0
  %645 = vmatpush1.bf16.msra.mxu0 0
  %646 = vmatprep.subr.bf16.mxu0 0
  %647 = vmatpush1.bf16.msra.mxu0 0
  %648 = vmatprep.mubr.bf16.mxu0 0
  %649 = vmatmul.mubr.bf16.gmra.mrb[0].mxu0 %v615
  %v650 = vpop.f32.mrb[0].mxu0
  %v651 = vadd.f32 0.0, %v650
  %v652 = vpop.f32.mrb[0].mxu0
  %v653 = vadd.f32 0.0, %v652
  %v654 = vpop.f32.mrb[0].mxu0
  %v655 = vpop.f32.mrb[0].mxu0
  %656 = vdwg.mxu0
  %657 = vmatprep.subr.bf16.mxu0 0
  %658 = vmatpush1.bf16.msra.mxu0 %v358
  %659 = vmatprep.subr.bf16.mxu0 0
  %660 = vmatpush1.bf16.msra.mxu0 %v361
  %661 = vmatprep.subr.bf16.mxu0 0
  %662 = vmatpush1.bf16.msra.mxu0 %v364
  %663 = vmatprep.subr.bf16.mxu0 0
  %664 = vmatpush1.bf16.msra.mxu0 %v367
  %665 = vmatprep.subr.bf16.mxu0 0
  %666 = vmatpush1.bf16.msra.mxu0 %v370
  %667 = vmatprep.subr.bf16.mxu0 0
  %668 = vmatpush1.bf16.msra.mxu0 %v373
  %669 = vmatprep.subr.bf16.mxu0 0
  %670 = vmatpush1.bf16.msra.mxu0 %v376
  %671 = vmatprep.subr.bf16.mxu0 0
  %672 = vmatpush1.bf16.msra.mxu0 %v379
  %673 = vmatprep.subr.bf16.mxu0 0
  %674 = vmatpush1.bf16.msra.mxu0 0
  %675 = vmatprep.subr.bf16.mxu0 0
  %676 = vmatpush1.bf16.msra.mxu0 0
  %677 = vmatprep.subr.bf16.mxu0 0
  %678 = vmatpush1.bf16.msra.mxu0 0
  %679 = vmatprep.subr.bf16.mxu0 0
  %680 = vmatpush1.bf16.msra.mxu0 0
  %681 = vmatprep.subr.bf16.mxu0 0
  %682 = vmatpush1.bf16.msra.mxu0 0
  %683 = vmatprep.subr.bf16.mxu0 0
  %684 = vmatpush1.bf16.msra.mxu0 0
  %685 = vmatprep.subr.bf16.mxu0 0
  %686 = vmatpush1.bf16.msra.mxu0 0
  %687 = vmatprep.subr.bf16.mxu0 0
  %688 = vmatpush1.bf16.msra.mxu0 0
  %689 = vmatprep.mubr.bf16.mxu0 0
  %690 = vmatmul.mubr.bf16.gmra.mrb[0].mxu0 %v615
  %v691 = vpop.f32.mrb[0].mxu0
  %v692 = vadd.f32 0.0, %v691
  %v693 = vpop.f32.mrb[0].mxu0
  %v694 = vpop.f32.mrb[0].mxu0
  %v695 = vpop.f32.mrb[0].mxu0
  %696 = vdwg.mxu0
  %v697 = vadd.f32 %v150, %v651
  %v698 = vxor.u32 %v697, 2147483648
  %v699 = vmul.f32 %v698, 1.442695
  %v700 = vpow.pop %v699
  %v701 = vadd.f32 %v700, 1.0
  %v702 = vrcp.pop %v701
  %v703 = vmul.f32 1.0, %v702
  %v704 = vadd.f32 %v152, %v653
  %v705 = vxor.u32 %v704, 2147483648
  %v706 = vmul.f32 %v705, 1.442695
  %v707 = vpow.pop %v706
  %v708 = vadd.f32 %v707, 1.0
  %v709 = vrcp.pop %v708
  %v710 = vmul.f32 1.0, %v709
  %v711 = vadd.f32 %v692, %v503
  %v712 = vmul.f32 %v703, %v711
  %v713 = vadd.f32 %v221, %v712
  %v714 = vtanh.pop %v713
  %v715 = vsub.f32 %v614, %v714
  %v716 = vmul.f32 %v710, %v715
  %v717 = vadd.f32 %v714, %v716
  %v718 = vpack.c.bf16 %v717, %v717
  %719 = vmatprep.subr.bf16.mxu0 %v357
  %720 = vmatpush1.bf16.msra.mxu0 %v356
  %721 = vmatprep.subr.bf16.mxu0 %v360
  %722 = vmatpush1.bf16.msra.mxu0 %v359
  %723 = vmatprep.subr.bf16.mxu0 %v363
  %724 = vmatpush1.bf16.msra.mxu0 %v362
  %725 = vmatprep.subr.bf16.mxu0 %v366
  %726 = vmatpush1.bf16.msra.mxu0 %v365
  %727 = vmatprep.subr.bf16.mxu0 %v369
  %728 = vmatpush1.bf16.msra.mxu0 %v368
  %729 = vmatprep.subr.bf16.mxu0 %v372
  %730 = vmatpush1.bf16.msra.mxu0 %v371
  %731 = vmatprep.subr.bf16.mxu0 %v375
  %732 = vmatpush1.bf16.msra.mxu0 %v374
  %733 = vmatprep.subr.bf16.mxu0 %v378
  %734 = vmatpush1.bf16.msra.mxu0 %v377
  %735 = vmatprep.subr.bf16.mxu0 0
  %736 = vmatpush1.bf16.msra.mxu0 0
  %737 = vmatprep.subr.bf16.mxu0 0
  %738 = vmatpush1.bf16.msra.mxu0 0
  %739 = vmatprep.subr.bf16.mxu0 0
  %740 = vmatpush1.bf16.msra.mxu0 0
  %741 = vmatprep.subr.bf16.mxu0 0
  %742 = vmatpush1.bf16.msra.mxu0 0
  %743 = vmatprep.subr.bf16.mxu0 0
  %744 = vmatpush1.bf16.msra.mxu0 0
  %745 = vmatprep.subr.bf16.mxu0 0
  %746 = vmatpush1.bf16.msra.mxu0 0
  %747 = vmatprep.subr.bf16.mxu0 0
  %748 = vmatpush1.bf16.msra.mxu0 0
  %749 = vmatprep.subr.bf16.mxu0 0
  %750 = vmatpush1.bf16.msra.mxu0 0
  %751 = vmatprep.mubr.bf16.mxu0 0
  %752 = vmatmul.mubr.bf16.gmra.mrb[0].mxu0 %v718
  %v753 = vpop.f32.mrb[0].mxu0
  %v754 = vadd.f32 0.0, %v753
  %v755 = vpop.f32.mrb[0].mxu0
  %v756 = vadd.f32 0.0, %v755
  %v757 = vpop.f32.mrb[0].mxu0
  %v758 = vpop.f32.mrb[0].mxu0
  %759 = vdwg.mxu0
  %760 = vmatprep.subr.bf16.mxu0 0
  %761 = vmatpush1.bf16.msra.mxu0 %v358
  %762 = vmatprep.subr.bf16.mxu0 0
  %763 = vmatpush1.bf16.msra.mxu0 %v361
  %764 = vmatprep.subr.bf16.mxu0 0
  %765 = vmatpush1.bf16.msra.mxu0 %v364
  %766 = vmatprep.subr.bf16.mxu0 0
  %767 = vmatpush1.bf16.msra.mxu0 %v367
  %768 = vmatprep.subr.bf16.mxu0 0
  %769 = vmatpush1.bf16.msra.mxu0 %v370
  %770 = vmatprep.subr.bf16.mxu0 0
  %771 = vmatpush1.bf16.msra.mxu0 %v373
  %772 = vmatprep.subr.bf16.mxu0 0
  %773 = vmatpush1.bf16.msra.mxu0 %v376
  %774 = vmatprep.subr.bf16.mxu0 0
  %775 = vmatpush1.bf16.msra.mxu0 %v379
  %776 = vmatprep.subr.bf16.mxu0 0
  %777 = vmatpush1.bf16.msra.mxu0 0
  %778 = vmatprep.subr.bf16.mxu0 0
  %779 = vmatpush1.bf16.msra.mxu0 0
  %780 = vmatprep.subr.bf16.mxu0 0
  %781 = vmatpush1.bf16.msra.mxu0 0
  %782 = vmatprep.subr.bf16.mxu0 0
  %783 = vmatpush1.bf16.msra.mxu0 0
  %784 = vmatprep.subr.bf16.mxu0 0
  %785 = vmatpush1.bf16.msra.mxu0 0
  %786 = vmatprep.subr.bf16.mxu0 0
  %787 = vmatpush1.bf16.msra.mxu0 0
  %788 = vmatprep.subr.bf16.mxu0 0
  %789 = vmatpush1.bf16.msra.mxu0 0
  %790 = vmatprep.subr.bf16.mxu0 0
  %791 = vmatpush1.bf16.msra.mxu0 0
  %792 = vmatprep.mubr.bf16.mxu0 0
  %793 = vmatmul.mubr.bf16.gmra.mrb[0].mxu0 %v718
  %v794 = vpop.f32.mrb[0].mxu0
  %v795 = vadd.f32 0.0, %v794
  %v796 = vpop.f32.mrb[0].mxu0
  %v797 = vpop.f32.mrb[0].mxu0
  %v798 = vpop.f32.mrb[0].mxu0
  %799 = vdwg.mxu0
  %v800 = vadd.f32 %v154, %v754
  %v801 = vxor.u32 %v800, 2147483648
  %v802 = vmul.f32 %v801, 1.442695
  %v803 = vpow.pop %v802
  %v804 = vadd.f32 %v803, 1.0
  %v805 = vrcp.pop %v804
  %v806 = vmul.f32 1.0, %v805
  %v807 = vadd.f32 %v156, %v756
  %v808 = vxor.u32 %v807, 2147483648
  %v809 = vmul.f32 %v808, 1.442695
  %v810 = vpow.pop %v809
  %v811 = vadd.f32 %v810, 1.0
  %v812 = vrcp.pop %v811
  %v813 = vmul.f32 1.0, %v812
  %v814 = vadd.f32 %v795, %v503
  %v815 = vmul.f32 %v806, %v814
  %v816 = vadd.f32 %v224, %v815
  %v817 = vtanh.pop %v816
  %v818 = vsub.f32 %v717, %v817
  %v819 = vmul.f32 %v813, %v818
  %v820 = vadd.f32 %v817, %v819
  %v821 = vpack.c.bf16 %v820, %v820
  %822 = vmatprep.subr.bf16.mxu0 %v357
  %823 = vmatpush1.bf16.msra.mxu0 %v356
  %824 = vmatprep.subr.bf16.mxu0 %v360
  %825 = vmatpush1.bf16.msra.mxu0 %v359
  %826 = vmatprep.subr.bf16.mxu0 %v363
  %827 = vmatpush1.bf16.msra.mxu0 %v362
  %828 = vmatprep.subr.bf16.mxu0 %v366
  %829 = vmatpush1.bf16.msra.mxu0 %v365
  %830 = vmatprep.subr.bf16.mxu0 %v369
  %831 = vmatpush1.bf16.msra.mxu0 %v368
  %832 = vmatprep.subr.bf16.mxu0 %v372
  %833 = vmatpush1.bf16.msra.mxu0 %v371
  %834 = vmatprep.subr.bf16.mxu0 %v375
  %835 = vmatpush1.bf16.msra.mxu0 %v374
  %836 = vmatprep.subr.bf16.mxu0 %v378
  %837 = vmatpush1.bf16.msra.mxu0 %v377
  %838 = vmatprep.subr.bf16.mxu0 0
  %839 = vmatpush1.bf16.msra.mxu0 0
  %840 = vmatprep.subr.bf16.mxu0 0
  %841 = vmatpush1.bf16.msra.mxu0 0
  %842 = vmatprep.subr.bf16.mxu0 0
  %843 = vmatpush1.bf16.msra.mxu0 0
  %844 = vmatprep.subr.bf16.mxu0 0
  %845 = vmatpush1.bf16.msra.mxu0 0
  %846 = vmatprep.subr.bf16.mxu0 0
  %847 = vmatpush1.bf16.msra.mxu0 0
  %848 = vmatprep.subr.bf16.mxu0 0
  %849 = vmatpush1.bf16.msra.mxu0 0
  %850 = vmatprep.subr.bf16.mxu0 0
  %851 = vmatpush1.bf16.msra.mxu0 0
  %852 = vmatprep.subr.bf16.mxu0 0
  %853 = vmatpush1.bf16.msra.mxu0 0
  %854 = vmatprep.mubr.bf16.mxu0 0
  %855 = vmatmul.mubr.bf16.gmra.mrb[0].mxu0 %v821
  %v856 = vpop.f32.mrb[0].mxu0
  %v857 = vadd.f32 0.0, %v856
  %v858 = vpop.f32.mrb[0].mxu0
  %v859 = vadd.f32 0.0, %v858
  %v860 = vpop.f32.mrb[0].mxu0
  %v861 = vpop.f32.mrb[0].mxu0
  %862 = vdwg.mxu0
  %863 = vmatprep.subr.bf16.mxu0 0
  %864 = vmatpush1.bf16.msra.mxu0 %v358
  %865 = vmatprep.subr.bf16.mxu0 0
  %866 = vmatpush1.bf16.msra.mxu0 %v361
  %867 = vmatprep.subr.bf16.mxu0 0
  %868 = vmatpush1.bf16.msra.mxu0 %v364
  %869 = vmatprep.subr.bf16.mxu0 0
  %870 = vmatpush1.bf16.msra.mxu0 %v367
  %871 = vmatprep.subr.bf16.mxu0 0
  %872 = vmatpush1.bf16.msra.mxu0 %v370
  %873 = vmatprep.subr.bf16.mxu0 0
  %874 = vmatpush1.bf16.msra.mxu0 %v373
  %875 = vmatprep.subr.bf16.mxu0 0
  %876 = vmatpush1.bf16.msra.mxu0 %v376
  %877 = vmatprep.subr.bf16.mxu0 0
  %878 = vmatpush1.bf16.msra.mxu0 %v379
  %879 = vmatprep.subr.bf16.mxu0 0
  %880 = vmatpush1.bf16.msra.mxu0 0
  %881 = vmatprep.subr.bf16.mxu0 0
  %882 = vmatpush1.bf16.msra.mxu0 0
  %883 = vmatprep.subr.bf16.mxu0 0
  %884 = vmatpush1.bf16.msra.mxu0 0
  %885 = vmatprep.subr.bf16.mxu0 0
  %886 = vmatpush1.bf16.msra.mxu0 0
  %887 = vmatprep.subr.bf16.mxu0 0
  %888 = vmatpush1.bf16.msra.mxu0 0
  %889 = vmatprep.subr.bf16.mxu0 0
  %890 = vmatpush1.bf16.msra.mxu0 0
  %891 = vmatprep.subr.bf16.mxu0 0
  %892 = vmatpush1.bf16.msra.mxu0 0
  %893 = vmatprep.subr.bf16.mxu0 0
  %894 = vmatpush1.bf16.msra.mxu0 0
  %895 = vmatprep.mubr.bf16.mxu0 0
  %896 = vmatmul.mubr.bf16.gmra.mrb[0].mxu0 %v821
  %v897 = vpop.f32.mrb[0].mxu0
  %v898 = vadd.f32 0.0, %v897
  %v899 = vpop.f32.mrb[0].mxu0
  %v900 = vpop.f32.mrb[0].mxu0
  %v901 = vpop.f32.mrb[0].mxu0
  %902 = vdwg.mxu0
  %v903 = vadd.f32 %v160, %v857
  %v904 = vxor.u32 %v903, 2147483648
  %v905 = vmul.f32 %v904, 1.442695
  %v906 = vpow.pop %v905
  %v907 = vadd.f32 %v906, 1.0
  %v908 = vrcp.pop %v907
  %v909 = vmul.f32 1.0, %v908
  %v910 = vadd.f32 %v162, %v859
  %v911 = vxor.u32 %v910, 2147483648
  %v912 = vmul.f32 %v911, 1.442695
  %v913 = vpow.pop %v912
  %v914 = vadd.f32 %v913, 1.0
  %v915 = vrcp.pop %v914
  %v916 = vmul.f32 1.0, %v915
  %v917 = vadd.f32 %v898, %v503
  %v918 = vmul.f32 %v909, %v917
  %v919 = vadd.f32 %v229, %v918
  %v920 = vtanh.pop %v919
  %v921 = vsub.f32 %v820, %v920
  %v922 = vmul.f32 %v916, %v921
  %v923 = vadd.f32 %v920, %v922
  %v924 = vpack.c.bf16 %v923, %v923
  %925 = vmatprep.subr.bf16.mxu0 %v357
  %926 = vmatpush1.bf16.msra.mxu0 %v356
  %927 = vmatprep.subr.bf16.mxu0 %v360
  %928 = vmatpush1.bf16.msra.mxu0 %v359
  %929 = vmatprep.subr.bf16.mxu0 %v363
  %930 = vmatpush1.bf16.msra.mxu0 %v362
  %931 = vmatprep.subr.bf16.mxu0 %v366
  %932 = vmatpush1.bf16.msra.mxu0 %v365
  %933 = vmatprep.subr.bf16.mxu0 %v369
  %934 = vmatpush1.bf16.msra.mxu0 %v368
  %935 = vmatprep.subr.bf16.mxu0 %v372
  %936 = vmatpush1.bf16.msra.mxu0 %v371
  %937 = vmatprep.subr.bf16.mxu0 %v375
  %938 = vmatpush1.bf16.msra.mxu0 %v374
  %939 = vmatprep.subr.bf16.mxu0 %v378
  %940 = vmatpush1.bf16.msra.mxu0 %v377
  %941 = vmatprep.subr.bf16.mxu0 0
  %942 = vmatpush1.bf16.msra.mxu0 0
  %943 = vmatprep.subr.bf16.mxu0 0
  %944 = vmatpush1.bf16.msra.mxu0 0
  %945 = vmatprep.subr.bf16.mxu0 0
  %946 = vmatpush1.bf16.msra.mxu0 0
  %947 = vmatprep.subr.bf16.mxu0 0
  %948 = vmatpush1.bf16.msra.mxu0 0
  %949 = vmatprep.subr.bf16.mxu0 0
  %950 = vmatpush1.bf16.msra.mxu0 0
  %951 = vmatprep.subr.bf16.mxu0 0
  %952 = vmatpush1.bf16.msra.mxu0 0
  %953 = vmatprep.subr.bf16.mxu0 0
  %954 = vmatpush1.bf16.msra.mxu0 0
  %955 = vmatprep.subr.bf16.mxu0 0
  %956 = vmatpush1.bf16.msra.mxu0 0
  %957 = vmatprep.mubr.bf16.mxu0 0
  %958 = vmatmul.mubr.bf16.gmra.mrb[0].mxu0 %v924
  %v959 = vpop.f32.mrb[0].mxu0
  %v960 = vadd.f32 0.0, %v959
  %v961 = vpop.f32.mrb[0].mxu0
  %v962 = vadd.f32 0.0, %v961
  %v963 = vpop.f32.mrb[0].mxu0
  %v964 = vpop.f32.mrb[0].mxu0
  %965 = vdwg.mxu0
  %966 = vmatprep.subr.bf16.mxu0 0
  %967 = vmatpush1.bf16.msra.mxu0 %v358
  %968 = vmatprep.subr.bf16.mxu0 0
  %969 = vmatpush1.bf16.msra.mxu0 %v361
  %970 = vmatprep.subr.bf16.mxu0 0
  %971 = vmatpush1.bf16.msra.mxu0 %v364
  %972 = vmatprep.subr.bf16.mxu0 0
  %973 = vmatpush1.bf16.msra.mxu0 %v367
  %974 = vmatprep.subr.bf16.mxu0 0
  %975 = vmatpush1.bf16.msra.mxu0 %v370
  %976 = vmatprep.subr.bf16.mxu0 0
  %977 = vmatpush1.bf16.msra.mxu0 %v373
  %978 = vmatprep.subr.bf16.mxu0 0
  %979 = vmatpush1.bf16.msra.mxu0 %v376
  %980 = vmatprep.subr.bf16.mxu0 0
  %981 = vmatpush1.bf16.msra.mxu0 %v379
  %982 = vmatprep.subr.bf16.mxu0 0
  %983 = vmatpush1.bf16.msra.mxu0 0
  %984 = vmatprep.subr.bf16.mxu0 0
  %985 = vmatpush1.bf16.msra.mxu0 0
  %986 = vmatprep.subr.bf16.mxu0 0
  %987 = vmatpush1.bf16.msra.mxu0 0
  %988 = vmatprep.subr.bf16.mxu0 0
  %989 = vmatpush1.bf16.msra.mxu0 0
  %990 = vmatprep.subr.bf16.mxu0 0
  %991 = vmatpush1.bf16.msra.mxu0 0
  %992 = vmatprep.subr.bf16.mxu0 0
  %993 = vmatpush1.bf16.msra.mxu0 0
  %994 = vmatprep.subr.bf16.mxu0 0
  %995 = vmatpush1.bf16.msra.mxu0 0
  %996 = vmatprep.subr.bf16.mxu0 0
  %997 = vmatpush1.bf16.msra.mxu0 0
  %998 = vmatprep.mubr.bf16.mxu0 0
  %999 = vmatmul.mubr.bf16.gmra.mrb[0].mxu0 %v924
  %v1000 = vpop.f32.mrb[0].mxu0
  %v1001 = vadd.f32 0.0, %v1000
  %v1002 = vpop.f32.mrb[0].mxu0
  %v1003 = vpop.f32.mrb[0].mxu0
  %v1004 = vpop.f32.mrb[0].mxu0
  %1005 = vdwg.mxu0
  %v1006 = vadd.f32 %v164, %v960
  %v1007 = vxor.u32 %v1006, 2147483648
  %v1008 = vmul.f32 %v1007, 1.442695
  %v1009 = vpow.pop %v1008
  %v1010 = vadd.f32 %v1009, 1.0
  %v1011 = vrcp.pop %v1010
  %v1012 = vmul.f32 1.0, %v1011
  %v1013 = vadd.f32 %v166, %v962
  %v1014 = vxor.u32 %v1013, 2147483648
  %v1015 = vmul.f32 %v1014, 1.442695
  %v1016 = vpow.pop %v1015
  %v1017 = vadd.f32 %v1016, 1.0
  %v1018 = vrcp.pop %v1017
  %v1019 = vmul.f32 1.0, %v1018
  %v1020 = vadd.f32 %v1001, %v503
  %v1021 = vmul.f32 %v1012, %v1020
  %v1022 = vadd.f32 %v232, %v1021
  %v1023 = vtanh.pop %v1022
  %v1024 = vsub.f32 %v923, %v1023
  %v1025 = vmul.f32 %v1019, %v1024
  %v1026 = vadd.f32 %v1023, %v1025
  %v1027 = vpack.c.bf16 %v1026, %v1026
  %1028 = vmatprep.subr.bf16.mxu0 %v357
  %1029 = vmatpush1.bf16.msra.mxu0 %v356
  %1030 = vmatprep.subr.bf16.mxu0 %v360
  %1031 = vmatpush1.bf16.msra.mxu0 %v359
  %1032 = vmatprep.subr.bf16.mxu0 %v363
  %1033 = vmatpush1.bf16.msra.mxu0 %v362
  %1034 = vmatprep.subr.bf16.mxu0 %v366
  %1035 = vmatpush1.bf16.msra.mxu0 %v365
  %1036 = vmatprep.subr.bf16.mxu0 %v369
  %1037 = vmatpush1.bf16.msra.mxu0 %v368
  %1038 = vmatprep.subr.bf16.mxu0 %v372
  %1039 = vmatpush1.bf16.msra.mxu0 %v371
  %1040 = vmatprep.subr.bf16.mxu0 %v375
  %1041 = vmatpush1.bf16.msra.mxu0 %v374
  %1042 = vmatprep.subr.bf16.mxu0 %v378
  %1043 = vmatpush1.bf16.msra.mxu0 %v377
  %1044 = vmatprep.subr.bf16.mxu0 0
  %1045 = vmatpush1.bf16.msra.mxu0 0
  %1046 = vmatprep.subr.bf16.mxu0 0
  %1047 = vmatpush1.bf16.msra.mxu0 0
  %1048 = vmatprep.subr.bf16.mxu0 0
  %1049 = vmatpush1.bf16.msra.mxu0 0
  %1050 = vmatprep.subr.bf16.mxu0 0
  %1051 = vmatpush1.bf16.msra.mxu0 0
  %1052 = vmatprep.subr.bf16.mxu0 0
  %1053 = vmatpush1.bf16.msra.mxu0 0
  %1054 = vmatprep.subr.bf16.mxu0 0
  %1055 = vmatpush1.bf16.msra.mxu0 0
  %1056 = vmatprep.subr.bf16.mxu0 0
  %1057 = vmatpush1.bf16.msra.mxu0 0
  %1058 = vmatprep.subr.bf16.mxu0 0
  %1059 = vmatpush1.bf16.msra.mxu0 0
  %1060 = vmatprep.mubr.bf16.mxu0 0
  %1061 = vmatmul.mubr.bf16.gmra.mrb[0].mxu0 %v1027
  %v1062 = vpop.f32.mrb[0].mxu0
  %v1063 = vadd.f32 0.0, %v1062
  %v1064 = vpop.f32.mrb[0].mxu0
  %v1065 = vadd.f32 0.0, %v1064
  %v1066 = vpop.f32.mrb[0].mxu0
  %v1067 = vpop.f32.mrb[0].mxu0
  %1068 = vdwg.mxu0
  %1069 = vmatprep.subr.bf16.mxu0 0
  %1070 = vmatpush1.bf16.msra.mxu0 %v358
  %1071 = vmatprep.subr.bf16.mxu0 0
  %1072 = vmatpush1.bf16.msra.mxu0 %v361
  %1073 = vmatprep.subr.bf16.mxu0 0
  %1074 = vmatpush1.bf16.msra.mxu0 %v364
  %1075 = vmatprep.subr.bf16.mxu0 0
  %1076 = vmatpush1.bf16.msra.mxu0 %v367
  %1077 = vmatprep.subr.bf16.mxu0 0
  %1078 = vmatpush1.bf16.msra.mxu0 %v370
  %1079 = vmatprep.subr.bf16.mxu0 0
  %1080 = vmatpush1.bf16.msra.mxu0 %v373
  %1081 = vmatprep.subr.bf16.mxu0 0
  %1082 = vmatpush1.bf16.msra.mxu0 %v376
  %1083 = vmatprep.subr.bf16.mxu0 0
  %1084 = vmatpush1.bf16.msra.mxu0 %v379
  %1085 = vmatprep.subr.bf16.mxu0 0
  %1086 = vmatpush1.bf16.msra.mxu0 0
  %1087 = vmatprep.subr.bf16.mxu0 0
  %1088 = vmatpush1.bf16.msra.mxu0 0
  %1089 = vmatprep.subr.bf16.mxu0 0
  %1090 = vmatpush1.bf16.msra.mxu0 0
  %1091 = vmatprep.subr.bf16.mxu0 0
  %1092 = vmatpush1.bf16.msra.mxu0 0
  %1093 = vmatprep.subr.bf16.mxu0 0
  %1094 = vmatpush1.bf16.msra.mxu0 0
  %1095 = vmatprep.subr.bf16.mxu0 0
  %1096 = vmatpush1.bf16.msra.mxu0 0
  %1097 = vmatprep.subr.bf16.mxu0 0
  %1098 = vmatpush1.bf16.msra.mxu0 0
  %1099 = vmatprep.subr.bf16.mxu0 0
  %1100 = vmatpush1.bf16.msra.mxu0 0
  %1101 = vmatprep.mubr.bf16.mxu0 0
  %1102 = vmatmul.mubr.bf16.gmra.mrb[0].mxu0 %v1027
  %v1103 = vpop.f32.mrb[0].mxu0
  %v1104 = vadd.f32 0.0, %v1103
  %v1105 = vpop.f32.mrb[0].mxu0
  %v1106 = vpop.f32.mrb[0].mxu0
  %v1107 = vpop.f32.mrb[0].mxu0
  %1108 = vdwg.mxu0
  %v1109 = vadd.f32 %v170, %v1063
  %v1110 = vxor.u32 %v1109, 2147483648
  %v1111 = vmul.f32 %v1110, 1.442695
  %v1112 = vpow.pop %v1111
  %v1113 = vadd.f32 %v1112, 1.0
  %v1114 = vrcp.pop %v1113
  %v1115 = vmul.f32 1.0, %v1114
  %v1116 = vadd.f32 %v172, %v1065
  %v1117 = vxor.u32 %v1116, 2147483648
  %v1118 = vmul.f32 %v1117, 1.442695
  %v1119 = vpow.pop %v1118
  %v1120 = vadd.f32 %v1119, 1.0
  %v1121 = vrcp.pop %v1120
  %v1122 = vmul.f32 1.0, %v1121
  %v1123 = vadd.f32 %v1104, %v503
  %v1124 = vmul.f32 %v1115, %v1123
  %v1125 = vadd.f32 %v237, %v1124
  %v1126 = vtanh.pop %v1125
  %v1127 = vsub.f32 %v1026, %v1126
  %v1128 = vmul.f32 %v1122, %v1127
  %v1129 = vadd.f32 %v1126, %v1128
  %v1130 = vpack.c.bf16 %v1129, %v1129
  %1131 = vmatprep.subr.bf16.mxu0 %v357
  %1132 = vmatpush1.bf16.msra.mxu0 %v356
  %1133 = vmatprep.subr.bf16.mxu0 %v360
  %1134 = vmatpush1.bf16.msra.mxu0 %v359
  %1135 = vmatprep.subr.bf16.mxu0 %v363
  %1136 = vmatpush1.bf16.msra.mxu0 %v362
  %1137 = vmatprep.subr.bf16.mxu0 %v366
  %1138 = vmatpush1.bf16.msra.mxu0 %v365
  %1139 = vmatprep.subr.bf16.mxu0 %v369
  %1140 = vmatpush1.bf16.msra.mxu0 %v368
  %1141 = vmatprep.subr.bf16.mxu0 %v372
  %1142 = vmatpush1.bf16.msra.mxu0 %v371
  %1143 = vmatprep.subr.bf16.mxu0 %v375
  %1144 = vmatpush1.bf16.msra.mxu0 %v374
  %1145 = vmatprep.subr.bf16.mxu0 %v378
  %1146 = vmatpush1.bf16.msra.mxu0 %v377
  %1147 = vmatprep.subr.bf16.mxu0 0
  %1148 = vmatpush1.bf16.msra.mxu0 0
  %1149 = vmatprep.subr.bf16.mxu0 0
  %1150 = vmatpush1.bf16.msra.mxu0 0
  %1151 = vmatprep.subr.bf16.mxu0 0
  %1152 = vmatpush1.bf16.msra.mxu0 0
  %1153 = vmatprep.subr.bf16.mxu0 0
  %1154 = vmatpush1.bf16.msra.mxu0 0
  %1155 = vmatprep.subr.bf16.mxu0 0
  %1156 = vmatpush1.bf16.msra.mxu0 0
  %1157 = vmatprep.subr.bf16.mxu0 0
  %1158 = vmatpush1.bf16.msra.mxu0 0
  %1159 = vmatprep.subr.bf16.mxu0 0
  %1160 = vmatpush1.bf16.msra.mxu0 0
  %1161 = vmatprep.subr.bf16.mxu0 0
  %1162 = vmatpush1.bf16.msra.mxu0 0
  %1163 = vmatprep.mubr.bf16.mxu0 0
  %1164 = vmatmul.mubr.bf16.gmra.mrb[0].mxu0 %v1130
  %v1165 = vpop.f32.mrb[0].mxu0
  %v1166 = vadd.f32 0.0, %v1165
  %v1167 = vpop.f32.mrb[0].mxu0
  %v1168 = vadd.f32 0.0, %v1167
  %v1169 = vpop.f32.mrb[0].mxu0
  %v1170 = vpop.f32.mrb[0].mxu0
  %1171 = vdwg.mxu0
  %1172 = vmatprep.subr.bf16.mxu0 0
  %1173 = vmatpush1.bf16.msra.mxu0 %v358
  %1174 = vmatprep.subr.bf16.mxu0 0
  %1175 = vmatpush1.bf16.msra.mxu0 %v361
  %1176 = vmatprep.subr.bf16.mxu0 0
  %1177 = vmatpush1.bf16.msra.mxu0 %v364
  %1178 = vmatprep.subr.bf16.mxu0 0
  %1179 = vmatpush1.bf16.msra.mxu0 %v367
  %1180 = vmatprep.subr.bf16.mxu0 0
  %1181 = vmatpush1.bf16.msra.mxu0 %v370
  %1182 = vmatprep.subr.bf16.mxu0 0
  %1183 = vmatpush1.bf16.msra.mxu0 %v373
  %1184 = vmatprep.subr.bf16.mxu0 0
  %1185 = vmatpush1.bf16.msra.mxu0 %v376
  %1186 = vmatprep.subr.bf16.mxu0 0
  %1187 = vmatpush1.bf16.msra.mxu0 %v379
  %1188 = vmatprep.subr.bf16.mxu0 0
  %1189 = vmatpush1.bf16.msra.mxu0 0
  %1190 = vmatprep.subr.bf16.mxu0 0
  %1191 = vmatpush1.bf16.msra.mxu0 0
  %1192 = vmatprep.subr.bf16.mxu0 0
  %1193 = vmatpush1.bf16.msra.mxu0 0
  %1194 = vmatprep.subr.bf16.mxu0 0
  %1195 = vmatpush1.bf16.msra.mxu0 0
  %1196 = vmatprep.subr.bf16.mxu0 0
  %1197 = vmatpush1.bf16.msra.mxu0 0
  %1198 = vmatprep.subr.bf16.mxu0 0
  %1199 = vmatpush1.bf16.msra.mxu0 0
  %1200 = vmatprep.subr.bf16.mxu0 0
  %1201 = vmatpush1.bf16.msra.mxu0 0
  %1202 = vmatprep.subr.bf16.mxu0 0
  %1203 = vmatpush1.bf16.msra.mxu0 0
  %1204 = vmatprep.mubr.bf16.mxu0 0
  %1205 = vmatmul.mubr.bf16.gmra.mrb[0].mxu0 %v1130
  %v1206 = vpop.f32.mrb[0].mxu0
  %v1207 = vadd.f32 0.0, %v1206
  %v1208 = vpop.f32.mrb[0].mxu0
  %v1209 = vpop.f32.mrb[0].mxu0
  %v1210 = vpop.f32.mrb[0].mxu0
  %1211 = vdwg.mxu0
  %v1212 = vadd.f32 %v174, %v1166
  %v1213 = vxor.u32 %v1212, 2147483648
  %v1214 = vmul.f32 %v1213, 1.442695
  %v1215 = vpow.pop %v1214
  %v1216 = vadd.f32 %v1215, 1.0
  %v1217 = vrcp.pop %v1216
  %v1218 = vmul.f32 1.0, %v1217
  %v1219 = vadd.f32 %v176, %v1168
  %v1220 = vxor.u32 %v1219, 2147483648
  %v1221 = vmul.f32 %v1220, 1.442695
  %v1222 = vpow.pop %v1221
  %v1223 = vadd.f32 %v1222, 1.0
  %v1224 = vrcp.pop %v1223
  %v1225 = vmul.f32 1.0, %v1224
  %v1226 = vadd.f32 %v1207, %v503
  %v1227 = vmul.f32 %v1218, %v1226
  %v1228 = vadd.f32 %v240, %v1227
  %v1229 = vtanh.pop %v1228
  %v1230 = vsub.f32 %v1129, %v1229
  %v1231 = vmul.f32 %v1225, %v1230
  %v1232 = vadd.f32 %v1229, %v1231
  %v1233 = vpack.c.bf16 %v1232, %v1232
  %v1234 = vld [vmem:[%s5] sm:$0xf]
  %v1235 = vld [vmem:[%s5 + $0x4] sm:$0xf]
  %v1236 = vld [vmem:[%s5 + $0x8] sm:$0xf]
  %v1237 = vld [vmem:[%s5 + $0xc] sm:$0xf]
  %v1238 = vld [vmem:[%s5 + $0x10] sm:$0xf]
  %v1239 = vld [vmem:[%s5 + $0x14] sm:$0xf]
  %v1240 = vld [vmem:[%s5 + $0x18] sm:$0xf]
  %v1241 = vld [vmem:[%s5 + $0x1c] sm:$0xf]
  %v1242 = vld [vmem:[%s5 + $0x20] sm:$0xf]
  %v1243 = vld [vmem:[%s5 + $0x24] sm:$0xf]
  %v1244 = vld [vmem:[%s5 + $0x28] sm:$0xf]
  %v1245 = vld [vmem:[%s5 + $0x2c] sm:$0xf]
  %v1246 = vld [vmem:[%s5 + $0x30] sm:$0xf]
  %v1247 = vld [vmem:[%s5 + $0x34] sm:$0xf]
  %v1248 = vld [vmem:[%s5 + $0x38] sm:$0xf]
  %v1249 = vld [vmem:[%s5 + $0x3c] sm:$0xf]
  %v1250 = vld [vmem:[%s6] sm:$0x1]
  %v1252 = vlaneseq
  %v1253 = vshrl.u32 %v1252, 7
  %v1254 = vsub.s32 0, %v1253
  %v1255 = vrot.slane %v1250, %v1254
  %v1273 = vunpack.c.l.b16 %v1234
  %v1274 = vunpack.c.l.b16 %v1235
  %v1275 = vunpack.c.l.b16 %v1236
  %v1276 = vunpack.c.l.b16 %v1237
  %v1277 = vunpack.c.l.b16 %v1238
  %v1278 = vunpack.c.l.b16 %v1239
  %v1279 = vunpack.c.l.b16 %v1240
  %v1280 = vunpack.c.l.b16 %v1241
  %v1281 = vunpack.c.l.b16 %v1242
  %v1282 = vunpack.c.l.b16 %v1243
  %v1283 = vunpack.c.l.b16 %v1244
  %v1284 = vunpack.c.l.b16 %v1245
  %v1285 = vunpack.c.l.b16 %v1246
  %v1286 = vunpack.c.l.b16 %v1247
  %v1287 = vunpack.c.l.b16 %v1248
  %v1288 = vunpack.c.l.b16 %v1249
  %v1289 = vpack.c.b16 %v1274, %v1273
  %v1290 = vpack.c.b16 %v1276, %v1275
  %v1291 = vpack.c.b16 %v1278, %v1277
  %v1292 = vpack.c.b16 %v1280, %v1279
  %v1293 = vpack.c.b16 %v1282, %v1281
  %v1294 = vpack.c.b16 %v1284, %v1283
  %v1295 = vpack.c.b16 %v1286, %v1285
  %v1296 = vpack.c.b16 %v1288, %v1287
  %1305 = vmatprep.subr.bf16.mxu0 0
  %1306 = vmatpush1.bf16.msra.mxu0 %v1289
  %1307 = vmatprep.subr.bf16.mxu0 0
  %1308 = vmatpush1.bf16.msra.mxu0 %v1290
  %1309 = vmatprep.subr.bf16.mxu0 0
  %1310 = vmatpush1.bf16.msra.mxu0 %v1291
  %1311 = vmatprep.subr.bf16.mxu0 0
  %1312 = vmatpush1.bf16.msra.mxu0 %v1292
  %1313 = vmatprep.subr.bf16.mxu0 0
  %1314 = vmatpush1.bf16.msra.mxu0 %v1293
  %1315 = vmatprep.subr.bf16.mxu0 0
  %1316 = vmatpush1.bf16.msra.mxu0 %v1294
  %1317 = vmatprep.subr.bf16.mxu0 0
  %1318 = vmatpush1.bf16.msra.mxu0 %v1295
  %1319 = vmatprep.subr.bf16.mxu0 0
  %1320 = vmatpush1.bf16.msra.mxu0 %v1296
  %1321 = vmatprep.subr.bf16.mxu0 0
  %1322 = vmatpush1.bf16.msra.mxu0 0
  %1323 = vmatprep.subr.bf16.mxu0 0
  %1324 = vmatpush1.bf16.msra.mxu0 0
  %1325 = vmatprep.subr.bf16.mxu0 0
  %1326 = vmatpush1.bf16.msra.mxu0 0
  %1327 = vmatprep.subr.bf16.mxu0 0
  %1328 = vmatpush1.bf16.msra.mxu0 0
  %1329 = vmatprep.subr.bf16.mxu0 0
  %1330 = vmatpush1.bf16.msra.mxu0 0
  %1331 = vmatprep.subr.bf16.mxu0 0
  %1332 = vmatpush1.bf16.msra.mxu0 0
  %1333 = vmatprep.subr.bf16.mxu0 0
  %1334 = vmatpush1.bf16.msra.mxu0 0
  %1335 = vmatprep.subr.bf16.mxu0 0
  %1336 = vmatpush1.bf16.msra.mxu0 0
  %1337 = vmatprep.mubr.bf16.mxu0 0
  %1338 = vmatmul.mubr.bf16.gmra.mrb[0].mxu0 %v1233
  %v1339 = vpop.f32.mrb[0].mxu0
  %v1340 = vadd.f32 %v1255, %v1339
  %v1341 = vpop.f32.mrb[0].mxu0
  %v1342 = vpop.f32.mrb[0].mxu0
  %v1343 = vpop.f32.mrb[0].mxu0
  %1344 = vdwg.mxu0
  %1345 = vst [vmem:[%s7] sm:$0xff] %v1340
  // Predicated region
  $region30: #{gru_classifier_forward.1} parent=0 // pred_check
    _
  $region31: #{gru_classifier_forward.1} parent=0 // pred_check_branch
    %1347 = sbr.rel (0) target = $region33
  $region32: #{gru_classifier_forward.1} parent=0 // pred_region
    _
  $region33: #{gru_classifier_forward.1} parent=0 // pred_fallthru
    _
  // Predicated region
  $region34: #{gru_classifier_forward.1} parent=0 // pred_check
    _
  $region35: #{gru_classifier_forward.1} parent=0 // pred_check_branch
    %1349 = sbr.rel (0) target = $region37
  $region36: #{gru_classifier_forward.1} parent=0 // pred_region
    _
  $region37: #{gru_classifier_forward.1} parent=0 // pred_fallthru
    _

</llo_original>
